<compile_context>
chip_gen: v6e
topology: v6e:2x2x1
jax: 0.10.0
libtpu: 0.0.40
codegen_flags: <defaults>
</compile_context>

<pallas_src>
import functools
import math

import jax
import jax.numpy as jnp
from jax.experimental import pallas as pl
from jax.experimental.pallas import tpu as pltpu

EPS = 1e-5
ACT_DTYPE = jnp.bfloat16  # activation / weight dtype on the MXU (f32 accumulate)


def _round_up(x, m):
    return -(-x // m) * m


# ---------------------------- Pallas kernels ----------------------------

def _mm_bn_act_kernel(a_ref, b_ref, s_ref, t_ref, o_ref, *, relu):
    # out = act((A @ B) * scale + bias); single K step (whole K fits VMEM).
    acc = jnp.dot(a_ref[...], b_ref[...], preferred_element_type=jnp.float32)
    acc = acc * s_ref[...] + t_ref[...]
    if relu:
        acc = jnp.maximum(acc, 0.0)
    o_ref[...] = acc.astype(o_ref.dtype)


def _mm_bn_res_act_kernel(a_ref, b_ref, s_ref, t_ref, r_ref, o_ref, *, relu):
    # conv + BN + residual add (+ ReLU) fused; residual kept bf16 in HBM,
    # upcast to f32 only inside the kernel.
    acc = jnp.dot(a_ref[...], b_ref[...], preferred_element_type=jnp.float32)
    acc = acc * s_ref[...] + t_ref[...] + r_ref[...].astype(jnp.float32)
    if relu:
        acc = jnp.maximum(acc, 0.0)
    o_ref[...] = acc.astype(o_ref.dtype)


def _maxpool_kernel(*refs):
    # Elementwise max over 9 lane-dense tap refs (VPU max tree).
    tap_refs, o_ref = refs[:-1], refs[-1]
    m = tap_refs[0][...]
    for r in tap_refs[1:]:
        m = jnp.maximum(m, r[...])
    o_ref[...] = m


# ------------------------- fused conv wrapper ---------------------------

def fused_conv_bn(x, conv, *, stride=1, dilation=1, padding=0,
                  relu=True, residual=None):
    """x: NHWC bf16 activation. conv: dict from _prep_conv (MXU-ready weight +
    folded BN scale/bias). Returns NHWC bf16."""
    N, H, W, Cin = x.shape
    kh, kw, Cout = conv["kh"], conv["kw"], conv["cout"]
    assert Cin == conv["cin"], (Cin, conv["cin"])
    b = conv["w"]                       # (Kp, Cp) bf16, zero padded at init
    Kp, Cp = b.shape
    K = kh * kw * Cin
    Ho = (H + 2 * padding - dilation * (kh - 1) - 1) // stride + 1
    Wo = (W + 2 * padding - dilation * (kw - 1) - 1) // stride + 1
    M = N * Ho * Wo

    # im2col (XLA glue, bf16): rows (N,Ho,Wo), cols (kh,kw,Cin) [+ zero pad->Kp].
    # TODO(synk): move this tap gather in-kernel (per-tap dots from a halo'd
    # VMEM slab) to cut 3x3-conv activation HBM traffic a further ~8x.
    if kh == 1 and kw == 1 and stride == 1 and padding == 0:
        if Kp == K:
            a = x.reshape(M, K)
        else:
            a = jnp.concatenate(
                [x, jnp.zeros((N, H, W, Kp - K), x.dtype)], axis=3).reshape(M, Kp)
    else:
        xp = jnp.pad(x, ((0, 0), (padding, padding), (padding, padding), (0, 0)))
        taps = []
        for di in range(kh):
            for dj in range(kw):
                hs, ws = di * dilation, dj * dilation
                taps.append(xp[:, hs:hs + (Ho - 1) * stride + 1:stride,
                               ws:ws + (Wo - 1) * stride + 1:stride, :])
        if Kp != K:
            taps.append(jnp.zeros((N, Ho, Wo, Kp - K), x.dtype))
        a = jnp.concatenate(taps, axis=3).reshape(M, Kp)

    scale, bias = conv["scale"], conv["bias"]

    # ---- tiling: single K step (Kp <= 4608 in this net), 2-D (M, Cout) grid ----
    tm = 512 if M >= 512 else M          # a full-M block is always a legal shape
    tn = 256 if Cp % 256 == 0 else 128
    m_tiles, n_tiles = pl.cdiv(M, tm), Cp // tn
    if m_tiles * n_tiles < 2:            # keep both v7x TensorCores busy
        if Cp >= 256:
            tn = 128
        elif M >= 32:
            tm = _round_up(-(-M // 2), 16)   # bf16 packs 16 sublanes per vreg
        m_tiles, n_tiles = pl.cdiv(M, tm), Cp // tn
    grid = (m_tiles, n_tiles)

    in_specs = [
        pl.BlockSpec((tm, Kp), lambda i, j: (i, 0)),
        pl.BlockSpec((Kp, tn), lambda i, j: (0, j)),
        pl.BlockSpec((1, tn), lambda i, j: (0, j)),
        pl.BlockSpec((1, tn), lambda i, j: (0, j)),
    ]
    args = [a, b, scale, bias]
    bytes_accessed = M * Kp * 2 + Kp * Cp * 2 + M * Cp * 2
    tile_bytes = 2 * (tm * Kp + Kp * tn + tm * tn) + 8 * tn
    if residual is not None:
        r = residual.reshape(M, Cout).astype(ACT_DTYPE)
        if Cp != Cout:
            r = jnp.pad(r, ((0, 0), (0, Cp - Cout)))
        in_specs.append(pl.BlockSpec((tm, tn), lambda i, j: (i, j)))
        args.append(r)
        bytes_accessed += M * Cp * 2
        tile_bytes += 2 * tm * tn
        kernel = functools.partial(_mm_bn_res_act_kernel, relu=relu)
    else:
        kernel = functools.partial(_mm_bn_act_kernel, relu=relu)

    # Right-sized VMEM: double-buffered tiles + headroom for the f32 dot result
    # (v7x only has 64 MiB per TensorCore, so do not claim a blanket 48 MiB).
    vmem_limit = int(min(2 * tile_bytes + (12 << 20), 48 << 20))

    out = pl.pallas_call(
        kernel,
        out_shape=jax.ShapeDtypeStruct((M, Cp), ACT_DTYPE),
        grid=grid,
        in_specs=in_specs,
        out_specs=pl.BlockSpec((tm, tn), lambda i, j: (i, j)),
        compiler_params=pltpu.CompilerParams(
            dimension_semantics=("parallel", "parallel"),
            vmem_limit_bytes=vmem_limit),
        cost_estimate=pl.CostEstimate(
            flops=2 * M * Kp * Cp, transcendentals=0,
            bytes_accessed=bytes_accessed),
    )(*args)
    if Cp != Cout:
        out = out[:, :Cout]
    return out.reshape(N, Ho, Wo, Cout)


def maxpool_3x3_s2_p1(x):
    """nn.MaxPool2d(kernel_size=3, stride=2, padding=1) on an NHWC bf16 input."""
    N, H, W, C = x.shape
    Ho = (H - 1) // 2 + 1
    Wo = (W - 1) // 2 + 1
    xp = jnp.pad(x, ((0, 0), (1, 1), (1, 1), (0, 0)), constant_values=-jnp.inf)

    # Lane-dense layout: rows = N*Ho, row length = Wo*C (>=128-wide stores).
    R, L = N * Ho, Wo * C
    taps = []
    for di in range(3):
        for dj in range(3):
            t = xp[:, di:di + 2 * (Ho - 1) + 1:2,
                   dj:dj + 2 * (Wo - 1) + 1:2, :]
            taps.append(t.reshape(R, L))
    # TODO(synk): an in-kernel windowed max over a halo'd VMEM slab would avoid
    # materializing the 9 tap arrays in HBM.

    itemsize = jnp.dtype(x.dtype).itemsize
    tr = min(256, max(8, ((8 << 20) // (10 * L * itemsize)) // 8 * 8))
    if R <= tr:
        tr = R
    grid = (pl.cdiv(R, tr),)
    spec = pl.BlockSpec((tr, L), lambda i: (i, 0))
    tile_bytes = 10 * tr * L * itemsize

    out = pl.pallas_call(
        _maxpool_kernel,
        out_shape=jax.ShapeDtypeStruct((R, L), x.dtype),
        grid=grid,
        in_specs=[spec] * 9,
        out_specs=spec,
        compiler_params=pltpu.CompilerParams(
            dimension_semantics=("parallel",),
            vmem_limit_bytes=int(min(2 * tile_bytes + (4 << 20), 48 << 20))),
        cost_estimate=pl.CostEstimate(
            flops=9 * R * L, transcendentals=0,
            bytes_accessed=10 * R * L * itemsize),
    )(*taps)
    return out.reshape(N, Ho, Wo, C)


# ---------------------------- parameters ---------------------------------

def _kaiming(key, cout, cin, kh, kw):
    # nn.init.kaiming_normal_ default: fan_in, leaky_relu gain sqrt(2)
    std = math.sqrt(2.0 / (cin * kh * kw))
    return std * jax.random.normal(key, (cout, cin, kh, kw), jnp.float32)


def _bn_params(c):
    # weight=1, bias=0 (constant init); running_mean=0, running_var=1
    # TODO(synk): training-mode BatchNorm (batch statistics) is not implemented.
    return (jnp.ones((c,), jnp.float32), jnp.zeros((c,), jnp.float32),
            jnp.zeros((c,), jnp.float32), jnp.ones((c,), jnp.float32))


def _prep_conv(w, bn):
    """Precompute (once, at init) the MXU-ready weight (K->Kp, Cout->Cp zero
    padded, bf16) and the folded inference-mode BatchNorm scale/bias (f32)."""
    cout, cin, kh, kw = w.shape
    k = kh * kw * cin
    kp, cp = _round_up(k, 128), _round_up(cout, 128)
    wt = jnp.transpose(w, (2, 3, 1, 0)).reshape(k, cout).astype(ACT_DTYPE)
    wt = jnp.pad(wt, ((0, kp - k), (0, cp - cout)))
    gamma, beta, mean, var = bn
    inv = gamma / jnp.sqrt(var + EPS)
    scale = jnp.pad(inv, (0, cp - cout)).astype(jnp.float32).reshape(1, cp)
    bias = jnp.pad(beta - mean * inv,
                   (0, cp - cout)).astype(jnp.float32).reshape(1, cp)
    return {"w": wt, "scale": scale, "bias": bias,
            "kh": kh, "kw": kw, "cin": cin, "cout": cout}


def _conv_bn(key, cout, cin, kh, kw):
    return _prep_conv(_kaiming(key, cout, cin, kh, kw), _bn_params(cout))


def _bottleneck_params(key, inplanes, planes, stride, rate, downsample):
    k1, k2, k3, k4 = jax.random.split(key, 4)
    p = {"stride": stride, "rate": rate,
         "conv1": _conv_bn(k1, planes, inplanes, 1, 1),
         "conv2": _conv_bn(k2, planes, planes, 3, 3),
         "conv3": _conv_bn(k3, 4 * planes, planes, 1, 1)}
    if downsample:
        p["down"] = _conv_bn(k4, 4 * planes, inplanes, 1, 1)
    return p


def _make_layer(key, inplanes, planes, blocks, stride, rate):
    keys = jax.random.split(key, max(blocks, 1))
    layers = [_bottleneck_params(keys[0], inplanes, planes, stride, rate, True)]
    for i in range(1, blocks):
        layers.append(_bottleneck_params(keys[i], 4 * planes, planes, 1, rate, False))
    return layers


def _make_mg_unit(key, inplanes, planes, stride=1, rate=1, blocks=(1, 2, 4)):
    keys = jax.random.split(key, 3)
    layers = [_bottleneck_params(keys[0], inplanes, planes, stride,
                                 rate * blocks[0], True)]
    for i in range(1, 3):
        layers.append(_bottleneck_params(keys[i], 4 * planes, planes, 1,
                                         rate * blocks[i], False))
    return layers


def init_resnet_features(key, block):
    k0, k1, k2, k3, k4 = jax.random.split(key, 5)
    return {"conv1": _conv_bn(k0, 64, 3, 7, 7),
            "layer1": _make_layer(k1, 64, 64, block[0], 1, 1),
            "layer2": _make_layer(k2, 256, 128, block[1], 2, 1),
            "layer3": _make_layer(k3, 512, 256, block[2], 2, 1),
            "layer4": _make_mg_unit(k4, 1024, 512, stride=1, rate=2)}


# ------------------------------ forward ----------------------------------

def bottleneck_forward(p, x):
    stride, rate = p["stride"], p["rate"]
    out = fused_conv_bn(x, p["conv1"], relu=True)
    out = fused_conv_bn(out, p["conv2"], stride=stride, dilation=rate,
                        padding=rate, relu=True)
    if "down" in p:
        residual = fused_conv_bn(x, p["down"], stride=stride, relu=False)
    else:
        residual = x
    # conv3 + bn3 + residual add + ReLU fused in a single Pallas kernel
    return fused_conv_bn(out, p["conv3"], relu=True, residual=residual)


def resnet_features_forward(params, x_nchw):
    # NCHW -> NHWC, bf16 activations end-to-end inside the backbone.
    x = jnp.transpose(x_nchw, (0, 2, 3, 1)).astype(ACT_DTYPE)
    x = fused_conv_bn(x, params["conv1"], stride=2, padding=3, relu=True)
    x = maxpool_3x3_s2_p1(x)
    for layer in ("layer1", "layer2", "layer3", "layer4"):
        for blk in params[layer]:
            x = bottleneck_forward(blk, x)
    return jnp.transpose(x, (0, 3, 1, 2)).astype(jnp.float32)  # NHWC -> NCHW


# -------------------------------- main ------------------------------------

if __name__ == "__main__":
    key = jax.random.PRNGKey(0)
    pkey, xkey = jax.random.split(key)
    # block = number of bottlenecks in layer1..3 (kept small; ResNet-101 = [3,4,23])
    block = (1, 1, 1)
    params = init_resnet_features(pkey, block)
    x = jax.random.normal(xkey, (2, 3, 64, 64), jnp.float32)  # NCHW input
    y = resnet_features_forward(params, x)
    y = jax.block_until_ready(y)
    assert y.shape == (2, 2048, 4, 4), y.shape
    assert jnp.all(jnp.isfinite(y))
    print("KERNEL_OK")
</pallas_src>

<mosaic_0001>
module attributes {stable_mosaic.version = 11 : i64} {
  func.func @_mm_bn_act_kernel(%arg0: i32, %arg1: i32, %arg2: memref<512x256xbf16, #tpu.memory_space<vmem>>, %arg3: memref<256x128xbf16, #tpu.memory_space<vmem>>, %arg4: memref<1x128xf32, #tpu.memory_space<vmem>>, %arg5: memref<1x128xf32, #tpu.memory_space<vmem>>, %arg6: memref<512x128xbf16, #tpu.memory_space<vmem>>) attributes {dimension_semantics = [#tpu.dimension_semantics<parallel>, #tpu.dimension_semantics<parallel>], iteration_bounds = array<i64: 4, 1>, scalar_prefetch = 0 : i64, scratch_operands = 0 : i64, tpu.core_type = #tpu.core_type<tc>, window_params = [{transform_indices = @transform_0, window_bounds = array<i64: 512, 256>}, {transform_indices = @transform_1, window_bounds = array<i64: 256, 128>}, {transform_indices = @transform_2, window_bounds = array<i64: 1, 128>}, {transform_indices = @transform_3, window_bounds = array<i64: 1, 128>}, {transform_indices = @transform_4, window_bounds = array<i64: 512, 128>}]} {
    %c0 = arith.constant 0 : index
    %c0_0 = arith.constant 0 : index
    %0 = vector.load %arg2[%c0, %c0_0] : memref<512x256xbf16, #tpu.memory_space<vmem>>, vector<512x256xbf16>
    %c0_1 = arith.constant 0 : index
    %c0_2 = arith.constant 0 : index
    %1 = vector.load %arg3[%c0_1, %c0_2] : memref<256x128xbf16, #tpu.memory_space<vmem>>, vector<256x128xbf16>
    %cst = arith.constant dense<0.000000e+00> : vector<512x128xf32>
    %2 = tpu.matmul %0, %1, %cst {dimension_numbers = #tpu.dot_dimension_numbers<[1], [0], [0], [1], [0, 0, 1, 1], [], []>} : vector<512x256xbf16>, vector<256x128xbf16>, vector<512x128xf32> -> vector<512x128xf32>
    %c0_3 = arith.constant 0 : index
    %c0_4 = arith.constant 0 : index
    %3 = vector.load %arg4[%c0_3, %c0_4] : memref<1x128xf32, #tpu.memory_space<vmem>>, vector<1x128xf32>
    %4 = vector.broadcast %3 : vector<1x128xf32> to vector<512x128xf32>
    %5 = arith.mulf %2, %4 : vector<512x128xf32>
    %c0_5 = arith.constant 0 : index
    %c0_6 = arith.constant 0 : index
    %6 = vector.load %arg5[%c0_5, %c0_6] : memref<1x128xf32, #tpu.memory_space<vmem>>, vector<1x128xf32>
    %7 = vector.broadcast %6 : vector<1x128xf32> to vector<512x128xf32>
    %8 = arith.addf %5, %7 : vector<512x128xf32>
    %cst_7 = arith.constant 0.000000e+00 : f32
    %9 = vector.broadcast %cst_7 : f32 to vector<512x128xf32>
    %10 = arith.maximumf %8, %9 : vector<512x128xf32>
    %11 = arith.truncf %10 : vector<512x128xf32> to vector<512x128xbf16>
    %c0_8 = arith.constant 0 : index
    %c0_9 = arith.constant 0 : index
    %12 = vector.load %arg6[%c0_8, %c0_9] : memref<512x128xbf16, #tpu.memory_space<vmem>>, vector<512x128xbf16>
    tpu.vector_store %arg6[%c0_8, %c0_9], %11 {strides = array<i32>} : memref<512x128xbf16, #tpu.memory_space<vmem>>, vector<512x128xbf16>,
    return
  }
  func.func @transform_0(%arg0: i32, %arg1: i32) -> (i32, i32) {
    %c0_i32 = arith.constant 0 : i32
    %c0_i32_0 = arith.constant 0 : i32
    return %arg0, %c0_i32 : i32, i32
  }
  func.func @transform_1(%arg0: i32, %arg1: i32) -> (i32, i32) {
    %c0_i32 = arith.constant 0 : i32
    %c0_i32_0 = arith.constant 0 : i32
    return %c0_i32, %arg1 : i32, i32
  }
  func.func @transform_2(%arg0: i32, %arg1: i32) -> (i32, i32) {
    %c0_i32 = arith.constant 0 : i32
    %c0_i32_0 = arith.constant 0 : i32
    return %c0_i32, %arg1 : i32, i32
  }
  func.func @transform_3(%arg0: i32, %arg1: i32) -> (i32, i32) {
    %c0_i32 = arith.constant 0 : i32
    %c0_i32_0 = arith.constant 0 : i32
    return %c0_i32, %arg1 : i32, i32
  }
  func.func @transform_4(%arg0: i32, %arg1: i32) -> (i32, i32) {
    %c0_i32 = arith.constant 0 : i32
    return %arg0, %arg1 : i32, i32
  }
}

</mosaic_0001>

<llo_original>
// kernel: tpu_custom_call.1
$region0: #{tpu_custom_call.1}
  #allocation0 [shape = 'u32[]', space=smem, size = 0x4, offset = 0x4, fixed_abs, tag = 'smem constant byte address 0x4 - core index']
  #allocation1 [shape = 'u32[144,128]{1,0:T(1,128)}', space=vmem, size = 0x12000, scoped, tag = 'internal scratch']
  %s0 = inlined_call_operand.hbm [shape: bf16[2048,256], index: 0, kind: input, shape index: {}]
  %s1 = inlined_call_operand.hbm [shape: bf16[256,128], index: 1, kind: input, shape index: {}]
  %s2 = inlined_call_operand.vmem [shape: f32[1,128], index: 2, kind: input, shape index: {}]
  %s3 = inlined_call_operand.vmem [shape: f32[1,128], index: 3, kind: input, shape index: {}]
  %s4 = inlined_call_operand.hbm [shape: bf16[2048,128], index: 4, kind: output, shape index: {}]
  %s5 = sld [smem:[#allocation0]]
  $region57: #{tpu_custom_call.1} parent=0
    _
  %s7 = ssub.s32 1, %s5
  %s8 = scalar_select 0, %s7, %s5
  $region1: #{tpu_custom_call.1} parent=0
    #allocation2 [shape = 'u8[524288]{0}', space=vmem, size = 0x80000, scoped, tag = 'input window, operand 0']
    #allocation3 [shape = 's32[2]{0}', space=sflag, size = 0x8, scoped, tag = 'scoped memory for tpu_custom_call.1']
    #allocation4 [shape = 's32[2]{0}', space=sflag, size = 0x8, scoped, tag = 'scoped memory for tpu_custom_call.1']
    #allocation5 [shape = 'u8[65536]{0}', space=vmem, size = 0x10000, scoped, tag = 'input window, operand 1, single buffered']
    #allocation6 [shape = 's32[1]{0}', space=sflag, size = 0x4, scoped, tag = 'scoped memory for tpu_custom_call.1']
    #allocation7 [shape = 'u8[262144]{0}', space=vmem, size = 0x40000, scoped, tag = 'output window, operand 0']
    %9 = vsyncpa [#allocation3], 0
    %s10 = scalar_lea.sflag [#allocation3], 1
    %11 = vsyncpa %s10, 0
    %12 = vsyncpa [#allocation6], 0
    %13 = vsyncpa [#allocation4], 0
    %s14 = scalar_lea.sflag [#allocation4], 1
    %15 = vsyncpa %s14, 0
    loop: start=0, step=1, limit=6
    $region2: #{tpu_custom_call.1} parent=1 // loop_pre_header
      _
    $region3: #{tpu_custom_call.1} parent=1 // loop_header
      %s17 = sphi 0, %s21
      %p18 = scmp.ge.s32.totalorder %s17, 6
      %s24 = sphi 0, %s36
      %s25 = sphi 0, %s32
      %s26 = sphi 0, %s24
      %s27 = sphi 0, %s25
      %s28 = sphi 0, %s26
      %s29 = sphi 0, %s27
      %s39 = sphi 0, %s41
      %s42 = sphi 0, %s39
      %s43 = sphi 0, %s42
      %s59 = sphi 0, %s43
      %s65 = sphi 0, %s67
      %s68 = sphi 0, %s65
      %s69 = sphi 0, %s68
      %s85 = sphi 0, %s69
      %s91 = sphi 0, %s93
      %s94 = sphi 0, %s91
      %s95 = sphi 0, %s94
      %s111 = sphi 0, %s95
      %s117 = sphi 0, %s119
      %s120 = sphi 0, %s117
      %s121 = sphi 0, %s120
      %s137 = sphi 0, %s121
      %s145 = sphi 0, %s147
      %s148 = sphi 0, %s145
      %s149 = sphi 0, %s148
      %s165 = sphi 0, %s149
    $region4: #{tpu_custom_call.1} parent=1 // loop_header_branch
      %20 = sbr.rel (%p18) target = $region8
    $region5: #{tpu_custom_call.1} parent=1 // loop_body
      %s22 = ssub.s32 %s17, 1
      %s23 = ssub.s32 %s17, 2
      %s30 = sadd.s32 1, %s25
      %p31 = scmp.ge.s32.totalorder %s30, 1
      %s32 = scalar_select %p31, 0, %s30
      %s33 = sadd.s32 1, %s24
      %s34 = scalar_select %p31, %s33, %s24
      %p35 = scmp.ge.s32.totalorder %s34, 4
      %s36 = scalar_select %p35, 0, %s34
      %s37 = ssub.s32 %s24, %s36
      %p38 = scmp.eq.s32.totalorder %s37, 0
      %s40 = sadd.s32 %s39, 1
      %s41 = scalar_select %p38, %s39, %s40
      %p44 = pneg %p38
      %p45 = scmp.eq.s32.totalorder %s17, 3
      %p46 = por %p44, %p45
      %p47 = scmp.ne.s32.totalorder %s39, %s42
      %p48 = scmp.eq.s32.totalorder %s17, 0
      %p49 = por %p47, %p48
      %p50 = scmp.ne.s32.totalorder %s39, %s42
      %p51 = scmp.eq.s32.totalorder %s22, 3
      %p52 = por %p50, %p51
      %p53 = scmp.ne.s32.totalorder %s42, %s43
      %p54 = scmp.eq.s32.totalorder %s22, 0
      %p55 = por %p53, %p54
      %p56 = scmp.ne.s32.totalorder %s42, %s43
      %p57 = scmp.eq.s32.totalorder %s23, 3
      %p58 = por %p56, %p57
      %p60 = scmp.ne.s32.totalorder %s43, %s59
      %p61 = scmp.eq.s32.totalorder %s23, 0
      %p62 = por %p60, %p61
      %s63 = ssub.s32 %s25, %s32
      %p64 = scmp.eq.s32.totalorder %s63, 0
      %s66 = sadd.s32 %s65, 1
      %s67 = scalar_select %p64, %s65, %s66
      %p70 = pneg %p64
      %p71 = scmp.eq.s32.totalorder %s17, 3
      %p72 = por %p70, %p71
      %p73 = scmp.ne.s32.totalorder %s65, %s68
      %p74 = scmp.eq.s32.totalorder %s17, 0
      %p75 = por %p73, %p74
      %p76 = scmp.ne.s32.totalorder %s65, %s68
      %p77 = scmp.eq.s32.totalorder %s22, 3
      %p78 = por %p76, %p77
      %p79 = scmp.ne.s32.totalorder %s68, %s69
      %p80 = scmp.eq.s32.totalorder %s22, 0
      %p81 = por %p79, %p80
      %p82 = scmp.ne.s32.totalorder %s68, %s69
      %p83 = scmp.eq.s32.totalorder %s23, 3
      %p84 = por %p82, %p83
      %p86 = scmp.ne.s32.totalorder %s69, %s85
      %p87 = scmp.eq.s32.totalorder %s23, 0
      %p88 = por %p86, %p87
      %s89 = ssub.s32 %s25, %s32
      %p90 = scmp.eq.s32.totalorder %s89, 0
      %s92 = sadd.s32 %s91, 1
      %s93 = scalar_select %p90, %s91, %s92
      %p96 = pneg %p90
      %p97 = scmp.eq.s32.totalorder %s17, 3
      %p98 = por %p96, %p97
      %p99 = scmp.ne.s32.totalorder %s91, %s94
      %p100 = scmp.eq.s32.totalorder %s17, 0
      %p101 = por %p99, %p100
      %p102 = scmp.ne.s32.totalorder %s91, %s94
      %p103 = scmp.eq.s32.totalorder %s22, 3
      %p104 = por %p102, %p103
      %p105 = scmp.ne.s32.totalorder %s94, %s95
      %p106 = scmp.eq.s32.totalorder %s22, 0
      %p107 = por %p105, %p106
      %p108 = scmp.ne.s32.totalorder %s94, %s95
      %p109 = scmp.eq.s32.totalorder %s23, 3
      %p110 = por %p108, %p109
      %p112 = scmp.ne.s32.totalorder %s95, %s111
      %p113 = scmp.eq.s32.totalorder %s23, 0
      %p114 = por %p112, %p113
      %s115 = ssub.s32 %s25, %s32
      %p116 = scmp.eq.s32.totalorder %s115, 0
      %s118 = sadd.s32 %s117, 1
      %s119 = scalar_select %p116, %s117, %s118
      %p122 = pneg %p116
      %p123 = scmp.eq.s32.totalorder %s17, 3
      %p124 = por %p122, %p123
      %p125 = scmp.ne.s32.totalorder %s117, %s120
      %p126 = scmp.eq.s32.totalorder %s17, 0
      %p127 = por %p125, %p126
      %p128 = scmp.ne.s32.totalorder %s117, %s120
      %p129 = scmp.eq.s32.totalorder %s22, 3
      %p130 = por %p128, %p129
      %p131 = scmp.ne.s32.totalorder %s120, %s121
      %p132 = scmp.eq.s32.totalorder %s22, 0
      %p133 = por %p131, %p132
      %p134 = scmp.ne.s32.totalorder %s120, %s121
      %p135 = scmp.eq.s32.totalorder %s23, 3
      %p136 = por %p134, %p135
      %p138 = scmp.ne.s32.totalorder %s121, %s137
      %p139 = scmp.eq.s32.totalorder %s23, 0
      %p140 = por %p138, %p139
      %s141 = ssub.s32 %s24, %s36
      %s142 = ssub.s32 %s25, %s32
      %s143 = sor.u32 %s141, %s142
      %p144 = scmp.eq.s32.totalorder %s143, 0
      %s146 = sadd.s32 %s145, 1
      %s147 = scalar_select %p144, %s145, %s146
      %p150 = pneg %p144
      %p151 = scmp.eq.s32.totalorder %s17, 3
      %p152 = por %p150, %p151
      %p153 = scmp.ne.s32.totalorder %s145, %s148
      %p154 = scmp.eq.s32.totalorder %s17, 0
      %p155 = por %p153, %p154
      %p156 = scmp.ne.s32.totalorder %s145, %s148
      %p157 = scmp.eq.s32.totalorder %s22, 3
      %p158 = por %p156, %p157
      %p159 = scmp.ne.s32.totalorder %s148, %s149
      %p160 = scmp.eq.s32.totalorder %s22, 0
      %p161 = por %p159, %p160
      %p162 = scmp.ne.s32.totalorder %s148, %s149
      %p163 = scmp.eq.s32.totalorder %s23, 3
      %p164 = por %p162, %p163
      %p166 = scmp.ne.s32.totalorder %s149, %s165
      %p167 = scmp.eq.s32.totalorder %s23, 0
      %p168 = por %p166, %p167
      %p169 = scmp.le.s32.totalorder 1, %s17
      %p170 = scmp.lt.s32.totalorder %s17, 5
      %p171 = pnand %p169, %p170
      %p172 = pneg %p171
      // Predicated region
      $region9: #{tpu_custom_call.1} parent=5 // pred_check
        _
      $region10: #{tpu_custom_call.1} parent=5 // pred_check_branch
        %174 = sbr.rel (%p171) target = $region12
      $region11: #{tpu_custom_call.1} parent=5 // pred_region
        %s175 = ssub.s32 %s17, 1
        // Predicated region
        $region13: #{tpu_custom_call.1} parent=11 // pred_check
          %p176 = pneg %p81
        $region14: #{tpu_custom_call.1} parent=11 // pred_check_branch
          %178 = sbr.rel (%p176) target = $region16
        $region15: #{tpu_custom_call.1} parent=11 // pred_region
          %s180 = ssub.s32 2048, 2048
          %181 = vsyncadd [#allocation6], %s180
          %s182 = smul.addr %s27, 64
          %s183 = scalar_lea.hbm %s1, %s182
          %s184 = sshll.u32 [#allocation5], 4
          %s185 = int_to_ptr.vmem [resolvable:$true] %s184
          %190 = dma.hbm_to_vmem [thread:$0]  %s183, 2048, %s185, [#allocation6], 64, 64, 4
        $region16: #{tpu_custom_call.1} parent=11 // pred_fallthru
          _
        // Predicated region
        $region17: #{tpu_custom_call.1} parent=11 // pred_check
          %p191 = pneg %p107
        $region18: #{tpu_custom_call.1} parent=11 // pred_check_branch
          %193 = sbr.rel (%p191) target = $region20
        $region19: #{tpu_custom_call.1} parent=11 // pred_region
          %p194 = scmp.lt.s32.totalorder %s27, 0
          %s195 = scalar_select %p194, %s27, 0
          %s196 = scalar_lea.vmem %s2, %s195
        $region20: #{tpu_custom_call.1} parent=11 // pred_fallthru
          _
        // Predicated region
        $region21: #{tpu_custom_call.1} parent=11 // pred_check
          %p197 = pneg %p133
        $region22: #{tpu_custom_call.1} parent=11 // pred_check_branch
          %199 = sbr.rel (%p197) target = $region24
        $region23: #{tpu_custom_call.1} parent=11 // pred_region
          %p200 = scmp.lt.s32.totalorder %s27, 0
          %s201 = scalar_select %p200, %s27, 0
          %s202 = scalar_lea.vmem %s3, %s201
        $region24: #{tpu_custom_call.1} parent=11 // pred_fallthru
          _
      $region12: #{tpu_custom_call.1} parent=5 // pred_fallthru
        _
      %p203 = scmp.lt.s32.totalorder %s17, 4
      // Predicated region
      $region25: #{tpu_custom_call.1} parent=5 // pred_check
        %p204 = pneg %p203
      $region26: #{tpu_custom_call.1} parent=5 // pred_check_branch
        %206 = sbr.rel (%p204) target = $region28
      $region27: #{tpu_custom_call.1} parent=5 // pred_region
        // Predicated region
        $region29: #{tpu_custom_call.1} parent=27 // pred_check
          %p207 = pneg %p49
        $region30: #{tpu_custom_call.1} parent=27 // pred_check_branch
          %209 = sbr.rel (%p207) target = $region32
        $region31: #{tpu_custom_call.1} parent=27 // pred_region
          %s210 = sand.u32 %s39, 1
          %s211 = scalar_lea.sflag [#allocation3], %s210
          %s212 = sand.u32 %s39, 1
          %s213 = smul.addr %s212, 512
          %s214 = scalar_lea.vmem [#allocation2], %s213
          %s215 = smul.u32 64, %s24
          %s217 = ssub.s32 8192, 8192
          %218 = vsyncadd %s211, %s217
          %s219 = smul.addr %s215, 2
          %s220 = smul.addr %s219, 64
          %s221 = scalar_lea.hbm %s0, %s220
          %s222 = sshll.u32 %s214, 4
          %s223 = int_to_ptr.vmem [resolvable:$true] %s222
          %228 = dma.hbm_to_vmem [thread:$0]  %s221, 8192, %s223, %s211, 128, 128, 8
        $region32: #{tpu_custom_call.1} parent=27 // pred_fallthru
          _
      $region28: #{tpu_custom_call.1} parent=5 // pred_fallthru
        _
      %p229 = scmp.le.s32.totalorder 1, %s17
      %p230 = scmp.lt.s32.totalorder %s17, 5
      %p231 = pnand %p229, %p230
      %p232 = pneg %p231
      // Predicated region
      $region33: #{tpu_custom_call.1} parent=5 // pred_check
        _
      $region34: #{tpu_custom_call.1} parent=5 // pred_check_branch
        %234 = sbr.rel (%p231) target = $region36
      $region35: #{tpu_custom_call.1} parent=5 // pred_region
        %s235 = ssub.s32 %s17, 1
        %s236 = sand.u32 %s42, 1
        %s237 = scalar_lea.sflag [#allocation3], %s236
        %s238 = sand.u32 %s42, 1
        %s239 = smul.addr %s238, 512
        %s240 = scalar_lea.vmem [#allocation2], %s239
        // Predicated region
        $region37: #{tpu_custom_call.1} parent=35 // pred_check
          %p241 = pneg %p55
        $region38: #{tpu_custom_call.1} parent=35 // pred_check_branch
          %243 = sbr.rel (%p241) target = $region40
        $region39: #{tpu_custom_call.1} parent=35 // pred_region
          %244 = dma.done %s237, 8192
        $region40: #{tpu_custom_call.1} parent=35 // pred_fallthru
          _
        // Predicated region
        $region41: #{tpu_custom_call.1} parent=35 // pred_check
          %p245 = pneg %p81
        $region42: #{tpu_custom_call.1} parent=35 // pred_check_branch
          %247 = sbr.rel (%p245) target = $region44
        $region43: #{tpu_custom_call.1} parent=35 // pred_region
          %248 = dma.done [#allocation6], 2048
        $region44: #{tpu_custom_call.1} parent=35 // pred_fallthru
          _
        %s249 = sand.u32 %s42, 1
        %s250 = scalar_lea.sflag [#allocation3], %s249
        %s251 = sand.u32 %s42, 1
        %s252 = smul.addr %s251, 512
        %s253 = scalar_lea.vmem [#allocation2], %s252
        %p254 = pneg %p55
        %p255 = pneg %p52
        %p256 = pneg %p81
        %p257 = pneg %p78
        %p258 = scmp.lt.s32.totalorder %s27, 0
        %s259 = scalar_select %p258, %s27, 0
        %s260 = scalar_lea.vmem %s2, %s259
        %p261 = pneg %p107
        %p262 = pneg %p104
        %p263 = scmp.lt.s32.totalorder %s27, 0
        %s264 = scalar_select %p263, %s27, 0
        %s265 = scalar_lea.vmem %s3, %s264
        %p266 = pneg %p133
        %p267 = pneg %p130
        %p268 = pneg %p161
        %p269 = pneg %p158
        %s270 = sand.u32 %s148, 1
        %s271 = scalar_lea.sflag [#allocation4], %s270
        %s272 = sand.u32 %s148, 1
        %s273 = smul.addr %s272, 256
        %s274 = scalar_lea.vmem [#allocation7], %s273
        %s275 = smul.u32 64, %s26
        %p276 = scmp.lt.s32.totalorder %s27, 0
        %s277 = scalar_select %p276, %s27, 0
        %s278 = scalar_lea.vmem %s2, %s277
        %p279 = scmp.lt.s32.totalorder %s27, 0
        %s280 = scalar_select %p279, %s27, 0
        %s281 = scalar_lea.vmem %s3, %s280
        %s282 = smul.u32 64, %s26
        %v284 = vld [vmem:[%s240] sm:$0xff]
        %v285 = vld [vmem:[%s240 + $0x8] sm:$0xff]
        %v286 = vld [vmem:[%s240 + $0x10] sm:$0xff]
        %v287 = vld [vmem:[%s240 + $0x18] sm:$0xff]
        %v288 = vld [vmem:[%s240 + $0x20] sm:$0xff]
        %v289 = vld [vmem:[%s240 + $0x28] sm:$0xff]
        %v290 = vld [vmem:[%s240 + $0x30] sm:$0xff]
        %v291 = vld [vmem:[%s240 + $0x38] sm:$0xff]
        %v292 = vld [vmem:[%s240 + $0x40] sm:$0xff]
        %v293 = vld [vmem:[%s240 + $0x48] sm:$0xff]
        %v294 = vld [vmem:[%s240 + $0x50] sm:$0xff]
        %v295 = vld [vmem:[%s240 + $0x58] sm:$0xff]
        %v296 = vld [vmem:[%s240 + $0x60] sm:$0xff]
        %v297 = vld [vmem:[%s240 + $0x68] sm:$0xff]
        %v298 = vld [vmem:[%s240 + $0x70] sm:$0xff]
        %v299 = vld [vmem:[%s240 + $0x78] sm:$0xff]
        %v300 = vld [vmem:[%s240 + $0x80] sm:$0xff]
        %v301 = vld [vmem:[%s240 + $0x88] sm:$0xff]
        %v302 = vld [vmem:[%s240 + $0x90] sm:$0xff]
        %v303 = vld [vmem:[%s240 + $0x98] sm:$0xff]
        %v304 = vld [vmem:[%s240 + $0xa0] sm:$0xff]
        %v305 = vld [vmem:[%s240 + $0xa8] sm:$0xff]
        %v306 = vld [vmem:[%s240 + $0xb0] sm:$0xff]
        %v307 = vld [vmem:[%s240 + $0xb8] sm:$0xff]
        %v308 = vld [vmem:[%s240 + $0xc0] sm:$0xff]
        %v309 = vld [vmem:[%s240 + $0xc8] sm:$0xff]
        %v310 = vld [vmem:[%s240 + $0xd0] sm:$0xff]
        %v311 = vld [vmem:[%s240 + $0xd8] sm:$0xff]
        %v312 = vld [vmem:[%s240 + $0xe0] sm:$0xff]
        %v313 = vld [vmem:[%s240 + $0xe8] sm:$0xff]
        %v314 = vld [vmem:[%s240 + $0xf0] sm:$0xff]
        %v315 = vld [vmem:[%s240 + $0xf8] sm:$0xff]
        %v316 = vld [vmem:[%s240 + $0x100] sm:$0xff]
        %v317 = vld [vmem:[%s240 + $0x108] sm:$0xff]
        %v318 = vld [vmem:[%s240 + $0x110] sm:$0xff]
        %v319 = vld [vmem:[%s240 + $0x118] sm:$0xff]
        %v320 = vld [vmem:[%s240 + $0x120] sm:$0xff]
        %v321 = vld [vmem:[%s240 + $0x128] sm:$0xff]
        %v322 = vld [vmem:[%s240 + $0x130] sm:$0xff]
        %v323 = vld [vmem:[%s240 + $0x138] sm:$0xff]
        %v324 = vld [vmem:[%s240 + $0x140] sm:$0xff]
        %v325 = vld [vmem:[%s240 + $0x148] sm:$0xff]
        %v326 = vld [vmem:[%s240 + $0x150] sm:$0xff]
        %v327 = vld [vmem:[%s240 + $0x158] sm:$0xff]
        %v328 = vld [vmem:[%s240 + $0x160] sm:$0xff]
        %v329 = vld [vmem:[%s240 + $0x168] sm:$0xff]
        %v330 = vld [vmem:[%s240 + $0x170] sm:$0xff]
        %v331 = vld [vmem:[%s240 + $0x178] sm:$0xff]
        %v332 = vld [vmem:[%s240 + $0x180] sm:$0xff]
        %v333 = vld [vmem:[%s240 + $0x188] sm:$0xff]
        %v334 = vld [vmem:[%s240 + $0x190] sm:$0xff]
        %v335 = vld [vmem:[%s240 + $0x198] sm:$0xff]
        %v336 = vld [vmem:[%s240 + $0x1a0] sm:$0xff]
        %v337 = vld [vmem:[%s240 + $0x1a8] sm:$0xff]
        %v338 = vld [vmem:[%s240 + $0x1b0] sm:$0xff]
        %v339 = vld [vmem:[%s240 + $0x1b8] sm:$0xff]
        %v340 = vld [vmem:[%s240 + $0x1c0] sm:$0xff]
        %v341 = vld [vmem:[%s240 + $0x1c8] sm:$0xff]
        %v342 = vld [vmem:[%s240 + $0x1d0] sm:$0xff]
        %v343 = vld [vmem:[%s240 + $0x1d8] sm:$0xff]
        %v344 = vld [vmem:[%s240 + $0x1e0] sm:$0xff]
        %v345 = vld [vmem:[%s240 + $0x1e8] sm:$0xff]
        %v346 = vld [vmem:[%s240 + $0x1f0] sm:$0xff]
        %v347 = vld [vmem:[%s240 + $0x1f8] sm:$0xff]
        %v348 = vld [vmem:[#allocation5] sm:$0xf]
        %v349 = vld [vmem:[#allocation5 + $0x4] sm:$0xf]
        %v350 = vld [vmem:[#allocation5 + $0x8] sm:$0xf]
        %v351 = vld [vmem:[#allocation5 + $0xc] sm:$0xf]
        %v352 = vld [vmem:[#allocation5 + $0x10] sm:$0xf]
        %v353 = vld [vmem:[#allocation5 + $0x14] sm:$0xf]
        %v354 = vld [vmem:[#allocation5 + $0x18] sm:$0xf]
        %v355 = vld [vmem:[#allocation5 + $0x1c] sm:$0xf]
        %v356 = vld [vmem:[#allocation5 + $0x20] sm:$0xf]
        %v357 = vld [vmem:[#allocation5 + $0x24] sm:$0xf]
        %v358 = vld [vmem:[#allocation5 + $0x28] sm:$0xf]
        %v359 = vld [vmem:[#allocation5 + $0x2c] sm:$0xf]
        %v360 = vld [vmem:[#allocation5 + $0x30] sm:$0xf]
        %v361 = vld [vmem:[#allocation5 + $0x34] sm:$0xf]
        %v362 = vld [vmem:[#allocation5 + $0x38] sm:$0xf]
        %v363 = vld [vmem:[#allocation5 + $0x3c] sm:$0xf]
        %v364 = vld [vmem:[#allocation5 + $0x40] sm:$0xf]
        %v365 = vld [vmem:[#allocation5 + $0x44] sm:$0xf]
        %v366 = vld [vmem:[#allocation5 + $0x48] sm:$0xf]
        %v367 = vld [vmem:[#allocation5 + $0x4c] sm:$0xf]
        %v368 = vld [vmem:[#allocation5 + $0x50] sm:$0xf]
        %v369 = vld [vmem:[#allocation5 + $0x54] sm:$0xf]
        %v370 = vld [vmem:[#allocation5 + $0x58] sm:$0xf]
        %v371 = vld [vmem:[#allocation5 + $0x5c] sm:$0xf]
        %v372 = vld [vmem:[#allocation5 + $0x60] sm:$0xf]
        %v373 = vld [vmem:[#allocation5 + $0x64] sm:$0xf]
        %v374 = vld [vmem:[#allocation5 + $0x68] sm:$0xf]
        %v375 = vld [vmem:[#allocation5 + $0x6c] sm:$0xf]
        %v376 = vld [vmem:[#allocation5 + $0x70] sm:$0xf]
        %v377 = vld [vmem:[#allocation5 + $0x74] sm:$0xf]
        %v378 = vld [vmem:[#allocation5 + $0x78] sm:$0xf]
        %v379 = vld [vmem:[#allocation5 + $0x7c] sm:$0xf]
        %v444 = vunpack.c.l.b16 %v284
        %v445 = vunpack.c.h.b16 %v284
        %v446 = vunpack.c.l.b16 %v285
        %v447 = vunpack.c.h.b16 %v285
        %v448 = vunpack.c.l.b16 %v286
        %v449 = vunpack.c.h.b16 %v286
        %v450 = vunpack.c.l.b16 %v287
        %v451 = vunpack.c.h.b16 %v287
        %v452 = vunpack.c.l.b16 %v288
        %v453 = vunpack.c.h.b16 %v288
        %v454 = vunpack.c.l.b16 %v289
        %v455 = vunpack.c.h.b16 %v289
        %v456 = vunpack.c.l.b16 %v290
        %v457 = vunpack.c.h.b16 %v290
        %v458 = vunpack.c.l.b16 %v291
        %v459 = vunpack.c.h.b16 %v291
        %v460 = vunpack.c.l.b16 %v292
        %v461 = vunpack.c.h.b16 %v292
        %v462 = vunpack.c.l.b16 %v293
        %v463 = vunpack.c.h.b16 %v293
        %v464 = vunpack.c.l.b16 %v294
        %v465 = vunpack.c.h.b16 %v294
        %v466 = vunpack.c.l.b16 %v295
        %v467 = vunpack.c.h.b16 %v295
        %v468 = vunpack.c.l.b16 %v296
        %v469 = vunpack.c.h.b16 %v296
        %v470 = vunpack.c.l.b16 %v297
        %v471 = vunpack.c.h.b16 %v297
        %v472 = vunpack.c.l.b16 %v298
        %v473 = vunpack.c.h.b16 %v298
        %v474 = vunpack.c.l.b16 %v299
        %v475 = vunpack.c.h.b16 %v299
        %v476 = vunpack.c.l.b16 %v300
        %v477 = vunpack.c.h.b16 %v300
        %v478 = vunpack.c.l.b16 %v301
        %v479 = vunpack.c.h.b16 %v301
        %v480 = vunpack.c.l.b16 %v302
        %v481 = vunpack.c.h.b16 %v302
        %v482 = vunpack.c.l.b16 %v303
        %v483 = vunpack.c.h.b16 %v303
        %v484 = vunpack.c.l.b16 %v304
        %v485 = vunpack.c.h.b16 %v304
        %v486 = vunpack.c.l.b16 %v305
        %v487 = vunpack.c.h.b16 %v305
        %v488 = vunpack.c.l.b16 %v306
        %v489 = vunpack.c.h.b16 %v306
        %v490 = vunpack.c.l.b16 %v307
        %v491 = vunpack.c.h.b16 %v307
        %v492 = vunpack.c.l.b16 %v308
        %v493 = vunpack.c.h.b16 %v308
        %v494 = vunpack.c.l.b16 %v309
        %v495 = vunpack.c.h.b16 %v309
        %v496 = vunpack.c.l.b16 %v310
        %v497 = vunpack.c.h.b16 %v310
        %v498 = vunpack.c.l.b16 %v311
        %v499 = vunpack.c.h.b16 %v311
        %v500 = vunpack.c.l.b16 %v312
        %v501 = vunpack.c.h.b16 %v312
        %v502 = vunpack.c.l.b16 %v313
        %v503 = vunpack.c.h.b16 %v313
        %v504 = vunpack.c.l.b16 %v314
        %v505 = vunpack.c.h.b16 %v314
        %v506 = vunpack.c.l.b16 %v315
        %v507 = vunpack.c.h.b16 %v315
        %v508 = vunpack.c.l.b16 %v316
        %v509 = vunpack.c.h.b16 %v316
        %v510 = vunpack.c.l.b16 %v317
        %v511 = vunpack.c.h.b16 %v317
        %v512 = vunpack.c.l.b16 %v318
        %v513 = vunpack.c.h.b16 %v318
        %v514 = vunpack.c.l.b16 %v319
        %v515 = vunpack.c.h.b16 %v319
        %v516 = vunpack.c.l.b16 %v320
        %v517 = vunpack.c.h.b16 %v320
        %v518 = vunpack.c.l.b16 %v321
        %v519 = vunpack.c.h.b16 %v321
        %v520 = vunpack.c.l.b16 %v322
        %v521 = vunpack.c.h.b16 %v322
        %v522 = vunpack.c.l.b16 %v323
        %v523 = vunpack.c.h.b16 %v323
        %v524 = vunpack.c.l.b16 %v324
        %v525 = vunpack.c.h.b16 %v324
        %v526 = vunpack.c.l.b16 %v325
        %v527 = vunpack.c.h.b16 %v325
        %v528 = vunpack.c.l.b16 %v326
        %v529 = vunpack.c.h.b16 %v326
        %v530 = vunpack.c.l.b16 %v327
        %v531 = vunpack.c.h.b16 %v327
        %v532 = vunpack.c.l.b16 %v328
        %v533 = vunpack.c.h.b16 %v328
        %v534 = vunpack.c.l.b16 %v329
        %v535 = vunpack.c.h.b16 %v329
        %v536 = vunpack.c.l.b16 %v330
        %v537 = vunpack.c.h.b16 %v330
        %v538 = vunpack.c.l.b16 %v331
        %v539 = vunpack.c.h.b16 %v331
        %v540 = vunpack.c.l.b16 %v332
        %v541 = vunpack.c.h.b16 %v332
        %v542 = vunpack.c.l.b16 %v333
        %v543 = vunpack.c.h.b16 %v333
        %v544 = vunpack.c.l.b16 %v334
        %v545 = vunpack.c.h.b16 %v334
        %v546 = vunpack.c.l.b16 %v335
        %v547 = vunpack.c.h.b16 %v335
        %v548 = vunpack.c.l.b16 %v336
        %v549 = vunpack.c.h.b16 %v336
        %v550 = vunpack.c.l.b16 %v337
        %v551 = vunpack.c.h.b16 %v337
        %v552 = vunpack.c.l.b16 %v338
        %v553 = vunpack.c.h.b16 %v338
        %v554 = vunpack.c.l.b16 %v339
        %v555 = vunpack.c.h.b16 %v339
        %v556 = vunpack.c.l.b16 %v340
        %v557 = vunpack.c.h.b16 %v340
        %v558 = vunpack.c.l.b16 %v341
        %v559 = vunpack.c.h.b16 %v341
        %v560 = vunpack.c.l.b16 %v342
        %v561 = vunpack.c.h.b16 %v342
        %v562 = vunpack.c.l.b16 %v343
        %v563 = vunpack.c.h.b16 %v343
        %v564 = vunpack.c.l.b16 %v344
        %v565 = vunpack.c.h.b16 %v344
        %v566 = vunpack.c.l.b16 %v345
        %v567 = vunpack.c.h.b16 %v345
        %v568 = vunpack.c.l.b16 %v346
        %v569 = vunpack.c.h.b16 %v346
        %v570 = vunpack.c.l.b16 %v347
        %v571 = vunpack.c.h.b16 %v347
        %v572 = vpack.c.b16 %v446, %v444
        %v573 = vpack.c.b16 %v447, %v445
        %v574 = vpack.c.b16 %v450, %v448
        %v575 = vpack.c.b16 %v451, %v449
        %v576 = vpack.c.b16 %v454, %v452
        %v577 = vpack.c.b16 %v455, %v453
        %v578 = vpack.c.b16 %v458, %v456
        %v579 = vpack.c.b16 %v459, %v457
        %v580 = vpack.c.b16 %v462, %v460
        %v581 = vpack.c.b16 %v463, %v461
        %v582 = vpack.c.b16 %v466, %v464
        %v583 = vpack.c.b16 %v467, %v465
        %v584 = vpack.c.b16 %v470, %v468
        %v585 = vpack.c.b16 %v471, %v469
        %v586 = vpack.c.b16 %v474, %v472
        %v587 = vpack.c.b16 %v475, %v473
        %v588 = vpack.c.b16 %v478, %v476
        %v589 = vpack.c.b16 %v479, %v477
        %v590 = vpack.c.b16 %v482, %v480
        %v591 = vpack.c.b16 %v483, %v481
        %v592 = vpack.c.b16 %v486, %v484
        %v593 = vpack.c.b16 %v487, %v485
        %v594 = vpack.c.b16 %v490, %v488
        %v595 = vpack.c.b16 %v491, %v489
        %v596 = vpack.c.b16 %v494, %v492
        %v597 = vpack.c.b16 %v495, %v493
        %v598 = vpack.c.b16 %v498, %v496
        %v599 = vpack.c.b16 %v499, %v497
        %v600 = vpack.c.b16 %v502, %v500
        %v601 = vpack.c.b16 %v503, %v501
        %v602 = vpack.c.b16 %v506, %v504
        %v603 = vpack.c.b16 %v507, %v505
        %v604 = vpack.c.b16 %v510, %v508
        %v605 = vpack.c.b16 %v511, %v509
        %v606 = vpack.c.b16 %v514, %v512
        %v607 = vpack.c.b16 %v515, %v513
        %v608 = vpack.c.b16 %v518, %v516
        %v609 = vpack.c.b16 %v519, %v517
        %v610 = vpack.c.b16 %v522, %v520
        %v611 = vpack.c.b16 %v523, %v521
        %v612 = vpack.c.b16 %v526, %v524
        %v613 = vpack.c.b16 %v527, %v525
        %v614 = vpack.c.b16 %v530, %v528
        %v615 = vpack.c.b16 %v531, %v529
        %v616 = vpack.c.b16 %v534, %v532
        %v617 = vpack.c.b16 %v535, %v533
        %v618 = vpack.c.b16 %v538, %v536
        %v619 = vpack.c.b16 %v539, %v537
        %v620 = vpack.c.b16 %v542, %v540
        %v621 = vpack.c.b16 %v543, %v541
        %v622 = vpack.c.b16 %v546, %v544
        %v623 = vpack.c.b16 %v547, %v545
        %v624 = vpack.c.b16 %v550, %v548
        %v625 = vpack.c.b16 %v551, %v549
        %v626 = vpack.c.b16 %v554, %v552
        %v627 = vpack.c.b16 %v555, %v553
        %v628 = vpack.c.b16 %v558, %v556
        %v629 = vpack.c.b16 %v559, %v557
        %v630 = vpack.c.b16 %v562, %v560
        %v631 = vpack.c.b16 %v563, %v561
        %v632 = vpack.c.b16 %v566, %v564
        %v633 = vpack.c.b16 %v567, %v565
        %v634 = vpack.c.b16 %v570, %v568
        %v635 = vpack.c.b16 %v571, %v569
        %v732 = vunpack.c.l.b16 %v348
        %v733 = vunpack.c.l.b16 %v349
        %v734 = vunpack.c.l.b16 %v350
        %v735 = vunpack.c.l.b16 %v351
        %v736 = vunpack.c.l.b16 %v352
        %v737 = vunpack.c.l.b16 %v353
        %v738 = vunpack.c.l.b16 %v354
        %v739 = vunpack.c.l.b16 %v355
        %v740 = vunpack.c.l.b16 %v356
        %v741 = vunpack.c.l.b16 %v357
        %v742 = vunpack.c.l.b16 %v358
        %v743 = vunpack.c.l.b16 %v359
        %v744 = vunpack.c.l.b16 %v360
        %v745 = vunpack.c.l.b16 %v361
        %v746 = vunpack.c.l.b16 %v362
        %v747 = vunpack.c.l.b16 %v363
        %v748 = vunpack.c.l.b16 %v364
        %v749 = vunpack.c.l.b16 %v365
        %v750 = vunpack.c.l.b16 %v366
        %v751 = vunpack.c.l.b16 %v367
        %v752 = vunpack.c.l.b16 %v368
        %v753 = vunpack.c.l.b16 %v369
        %v754 = vunpack.c.l.b16 %v370
        %v755 = vunpack.c.l.b16 %v371
        %v756 = vunpack.c.l.b16 %v372
        %v757 = vunpack.c.l.b16 %v373
        %v758 = vunpack.c.l.b16 %v374
        %v759 = vunpack.c.l.b16 %v375
        %v760 = vunpack.c.l.b16 %v376
        %v761 = vunpack.c.l.b16 %v377
        %v762 = vunpack.c.l.b16 %v378
        %v763 = vunpack.c.l.b16 %v379
        %v764 = vpack.c.b16 %v733, %v732
        %v765 = vpack.c.b16 %v735, %v734
        %v766 = vpack.c.b16 %v737, %v736
        %v767 = vpack.c.b16 %v739, %v738
        %v768 = vpack.c.b16 %v741, %v740
        %v769 = vpack.c.b16 %v743, %v742
        %v770 = vpack.c.b16 %v745, %v744
        %v771 = vpack.c.b16 %v747, %v746
        %v772 = vpack.c.b16 %v749, %v748
        %v773 = vpack.c.b16 %v751, %v750
        %v774 = vpack.c.b16 %v753, %v752
        %v775 = vpack.c.b16 %v755, %v754
        %v776 = vpack.c.b16 %v757, %v756
        %v777 = vpack.c.b16 %v759, %v758
        %v778 = vpack.c.b16 %v761, %v760
        %v779 = vpack.c.b16 %v763, %v762
        %796 = vmatprep.subr.bf16.mxu0 0
        %797 = vmatpush1.bf16.msra.mxu0 %v771
        %798 = vmatprep.subr.bf16.mxu0 0
        %799 = vmatpush1.bf16.msra.mxu0 %v770
        %800 = vmatprep.subr.bf16.mxu0 0
        %801 = vmatpush1.bf16.msra.mxu0 %v769
        %802 = vmatprep.subr.bf16.mxu0 0
        %803 = vmatpush1.bf16.msra.mxu0 %v768
        %804 = vmatprep.subr.bf16.mxu0 0
        %805 = vmatpush1.bf16.msra.mxu0 %v767
        %806 = vmatprep.subr.bf16.mxu0 0
        %807 = vmatpush1.bf16.msra.mxu0 %v766
        %808 = vmatprep.subr.bf16.mxu0 0
        %809 = vmatpush1.bf16.msra.mxu0 %v765
        %810 = vmatprep.subr.bf16.mxu0 0
        %811 = vmatpush1.bf16.msra.mxu0 %v764
        %812 = vmatprep.subr.bf16.mxu0 0
        %813 = vmatpush2.bf16.msra.mxu0 %v779
        %814 = vmatprep.subr.bf16.mxu0 0
        %815 = vmatpush2.bf16.msra.mxu0 %v778
        %816 = vmatprep.subr.bf16.mxu0 0
        %817 = vmatpush2.bf16.msra.mxu0 %v777
        %818 = vmatprep.subr.bf16.mxu0 0
        %819 = vmatpush2.bf16.msra.mxu0 %v776
        %820 = vmatprep.subr.bf16.mxu0 0
        %821 = vmatpush2.bf16.msra.mxu0 %v775
        %822 = vmatprep.subr.bf16.mxu0 0
        %823 = vmatpush2.bf16.msra.mxu0 %v774
        %824 = vmatprep.subr.bf16.mxu0 0
        %825 = vmatpush2.bf16.msra.mxu0 %v773
        %826 = vmatprep.subr.bf16.mxu0 0
        %827 = vmatpush2.bf16.msra.mxu0 %v772
        %828 = vmatprep.mubr.bf16.mxu0 %v573
        %829 = vmatmul.mubr.bf16.gmra.mxu0 %v572
        %v830 = vpop.f32.mrf.mxu0
        %v831 = vadd.f32 0.0, %v830
        %v832 = vpop.f32.mrf.mxu0
        %v833 = vpop.f32.mrf.mxu0
        %v834 = vadd.f32 0.0, %v833
        %v835 = vpop.f32.mrf.mxu0
        %836 = vmatprep.mubr.bf16.mxu0 %v575
        %837 = vmatmul.mubr.bf16.gmra.mxu0 %v574
        %v838 = vpop.f32.mrf.mxu0
        %v839 = vadd.f32 0.0, %v838
        %v840 = vpop.f32.mrf.mxu0
        %v841 = vpop.f32.mrf.mxu0
        %v842 = vadd.f32 0.0, %v841
        %v843 = vpop.f32.mrf.mxu0
        %844 = vmatprep.mubr.bf16.mxu0 %v577
        %845 = vmatmul.mubr.bf16.gmra.mxu0 %v576
        %v846 = vpop.f32.mrf.mxu0
        %v847 = vadd.f32 0.0, %v846
        %v848 = vpop.f32.mrf.mxu0
        %v849 = vpop.f32.mrf.mxu0
        %v850 = vadd.f32 0.0, %v849
        %v851 = vpop.f32.mrf.mxu0
        %852 = vmatprep.mubr.bf16.mxu0 %v579
        %853 = vmatmul.mubr.bf16.gmra.mxu0 %v578
        %v854 = vpop.f32.mrf.mxu0
        %v855 = vadd.f32 0.0, %v854
        %v856 = vpop.f32.mrf.mxu0
        %v857 = vpop.f32.mrf.mxu0
        %v858 = vadd.f32 0.0, %v857
        %v859 = vpop.f32.mrf.mxu0
        %860 = vmatprep.mubr.bf16.mxu0 %v581
        %861 = vmatmul.mubr.bf16.gmra.mxu0 %v580
        %v862 = vpop.f32.mrf.mxu0
        %v863 = vadd.f32 0.0, %v862
        %v864 = vpop.f32.mrf.mxu0
        %v865 = vpop.f32.mrf.mxu0
        %v866 = vadd.f32 0.0, %v865
        %v867 = vpop.f32.mrf.mxu0
        %868 = vmatprep.mubr.bf16.mxu0 %v583
        %869 = vmatmul.mubr.bf16.gmra.mxu0 %v582
        %v870 = vpop.f32.mrf.mxu0
        %v871 = vadd.f32 0.0, %v870
        %v872 = vpop.f32.mrf.mxu0
        %v873 = vpop.f32.mrf.mxu0
        %v874 = vadd.f32 0.0, %v873
        %v875 = vpop.f32.mrf.mxu0
        %876 = vmatprep.mubr.bf16.mxu0 %v585
        %877 = vmatmul.mubr.bf16.gmra.mxu0 %v584
        %v878 = vpop.f32.mrf.mxu0
        %v879 = vadd.f32 0.0, %v878
        %v880 = vpop.f32.mrf.mxu0
        %v881 = vpop.f32.mrf.mxu0
        %v882 = vadd.f32 0.0, %v881
        %v883 = vpop.f32.mrf.mxu0
        %884 = vmatprep.mubr.bf16.mxu0 %v587
        %885 = vmatmul.mubr.bf16.gmra.mxu0 %v586
        %v886 = vpop.f32.mrf.mxu0
        %v887 = vadd.f32 0.0, %v886
        %v888 = vpop.f32.mrf.mxu0
        %v889 = vpop.f32.mrf.mxu0
        %v890 = vadd.f32 0.0, %v889
        %v891 = vpop.f32.mrf.mxu0
        %892 = vmatprep.mubr.bf16.mxu0 %v589
        %893 = vmatmul.mubr.bf16.gmra.mxu0 %v588
        %v894 = vpop.f32.mrf.mxu0
        %v895 = vadd.f32 0.0, %v894
        %v896 = vpop.f32.mrf.mxu0
        %v897 = vpop.f32.mrf.mxu0
        %v898 = vadd.f32 0.0, %v897
        %v899 = vpop.f32.mrf.mxu0
        %900 = vmatprep.mubr.bf16.mxu0 %v591
        %901 = vmatmul.mubr.bf16.gmra.mxu0 %v590
        %v902 = vpop.f32.mrf.mxu0
        %v903 = vadd.f32 0.0, %v902
        %v904 = vpop.f32.mrf.mxu0
        %v905 = vpop.f32.mrf.mxu0
        %v906 = vadd.f32 0.0, %v905
        %v907 = vpop.f32.mrf.mxu0
        %908 = vmatprep.mubr.bf16.mxu0 %v593
        %909 = vmatmul.mubr.bf16.gmra.mxu0 %v592
        %v910 = vpop.f32.mrf.mxu0
        %v911 = vadd.f32 0.0, %v910
        %v912 = vpop.f32.mrf.mxu0
        %v913 = vpop.f32.mrf.mxu0
        %v914 = vadd.f32 0.0, %v913
        %v915 = vpop.f32.mrf.mxu0
        %916 = vmatprep.mubr.bf16.mxu0 %v595
        %917 = vmatmul.mubr.bf16.gmra.mxu0 %v594
        %v918 = vpop.f32.mrf.mxu0
        %v919 = vadd.f32 0.0, %v918
        %v920 = vpop.f32.mrf.mxu0
        %v921 = vpop.f32.mrf.mxu0
        %v922 = vadd.f32 0.0, %v921
        %v923 = vpop.f32.mrf.mxu0
        %924 = vmatprep.mubr.bf16.mxu0 %v597
        %925 = vmatmul.mubr.bf16.gmra.mxu0 %v596
        %v926 = vpop.f32.mrf.mxu0
        %v927 = vadd.f32 0.0, %v926
        %v928 = vpop.f32.mrf.mxu0
        %v929 = vpop.f32.mrf.mxu0
        %v930 = vadd.f32 0.0, %v929
        %v931 = vpop.f32.mrf.mxu0
        %932 = vmatprep.mubr.bf16.mxu0 %v599
        %933 = vmatmul.mubr.bf16.gmra.mxu0 %v598
        %v934 = vpop.f32.mrf.mxu0
        %v935 = vadd.f32 0.0, %v934
        %v936 = vpop.f32.mrf.mxu0
        %v937 = vpop.f32.mrf.mxu0
        %v938 = vadd.f32 0.0, %v937
        %v939 = vpop.f32.mrf.mxu0
        %940 = vmatprep.mubr.bf16.mxu0 %v601
        %941 = vmatmul.mubr.bf16.gmra.mxu0 %v600
        %v942 = vpop.f32.mrf.mxu0
        %v943 = vadd.f32 0.0, %v942
        %v944 = vpop.f32.mrf.mxu0
        %v945 = vpop.f32.mrf.mxu0
        %v946 = vadd.f32 0.0, %v945
        %v947 = vpop.f32.mrf.mxu0
        %948 = vmatprep.mubr.bf16.mxu0 %v603
        %949 = vmatmul.mubr.bf16.gmra.mxu0 %v602
        %v950 = vpop.f32.mrf.mxu0
        %v951 = vadd.f32 0.0, %v950
        %v952 = vpop.f32.mrf.mxu0
        %v953 = vpop.f32.mrf.mxu0
        %v954 = vadd.f32 0.0, %v953
        %v955 = vpop.f32.mrf.mxu0
        %956 = vmatprep.mubr.bf16.mxu0 %v605
        %957 = vmatmul.mubr.bf16.gmra.mxu0 %v604
        %v958 = vpop.f32.mrf.mxu0
        %v959 = vadd.f32 0.0, %v958
        %v960 = vpop.f32.mrf.mxu0
        %v961 = vpop.f32.mrf.mxu0
        %v962 = vadd.f32 0.0, %v961
        %v963 = vpop.f32.mrf.mxu0
        %964 = vmatprep.mubr.bf16.mxu0 %v607
        %965 = vmatmul.mubr.bf16.gmra.mxu0 %v606
        %v966 = vpop.f32.mrf.mxu0
        %v967 = vadd.f32 0.0, %v966
        %v968 = vpop.f32.mrf.mxu0
        %v969 = vpop.f32.mrf.mxu0
        %v970 = vadd.f32 0.0, %v969
        %v971 = vpop.f32.mrf.mxu0
        %972 = vmatprep.mubr.bf16.mxu0 %v609
        %973 = vmatmul.mubr.bf16.gmra.mxu0 %v608
        %v974 = vpop.f32.mrf.mxu0
        %v975 = vadd.f32 0.0, %v974
        %v976 = vpop.f32.mrf.mxu0
        %v977 = vpop.f32.mrf.mxu0
        %v978 = vadd.f32 0.0, %v977
        %v979 = vpop.f32.mrf.mxu0
        %980 = vmatprep.mubr.bf16.mxu0 %v611
        %981 = vmatmul.mubr.bf16.gmra.mxu0 %v610
        %v982 = vpop.f32.mrf.mxu0
        %v983 = vadd.f32 0.0, %v982
        %v984 = vpop.f32.mrf.mxu0
        %v985 = vpop.f32.mrf.mxu0
        %v986 = vadd.f32 0.0, %v985
        %v987 = vpop.f32.mrf.mxu0
        %988 = vmatprep.mubr.bf16.mxu0 %v613
        %989 = vmatmul.mubr.bf16.gmra.mxu0 %v612
        %v990 = vpop.f32.mrf.mxu0
        %v991 = vadd.f32 0.0, %v990
        %v992 = vpop.f32.mrf.mxu0
        %v993 = vpop.f32.mrf.mxu0
        %v994 = vadd.f32 0.0, %v993
        %v995 = vpop.f32.mrf.mxu0
        %996 = vmatprep.mubr.bf16.mxu0 %v615
        %997 = vmatmul.mubr.bf16.gmra.mxu0 %v614
        %v998 = vpop.f32.mrf.mxu0
        %v999 = vadd.f32 0.0, %v998
        %v1000 = vpop.f32.mrf.mxu0
        %v1001 = vpop.f32.mrf.mxu0
        %v1002 = vadd.f32 0.0, %v1001
        %v1003 = vpop.f32.mrf.mxu0
        %1004 = vmatprep.mubr.bf16.mxu0 %v617
        %1005 = vmatmul.mubr.bf16.gmra.mxu0 %v616
        %v1006 = vpop.f32.mrf.mxu0
        %v1007 = vadd.f32 0.0, %v1006
        %v1008 = vpop.f32.mrf.mxu0
        %v1009 = vpop.f32.mrf.mxu0
        %v1010 = vadd.f32 0.0, %v1009
        %v1011 = vpop.f32.mrf.mxu0
        %1012 = vmatprep.mubr.bf16.mxu0 %v619
        %1013 = vmatmul.mubr.bf16.gmra.mxu0 %v618
        %v1014 = vpop.f32.mrf.mxu0
        %v1015 = vadd.f32 0.0, %v1014
        %v1016 = vpop.f32.mrf.mxu0
        %v1017 = vpop.f32.mrf.mxu0
        %v1018 = vadd.f32 0.0, %v1017
        %v1019 = vpop.f32.mrf.mxu0
        %1020 = vmatprep.mubr.bf16.mxu0 %v621
        %1021 = vmatmul.mubr.bf16.gmra.mxu0 %v620
        %v1022 = vpop.f32.mrf.mxu0
        %v1023 = vadd.f32 0.0, %v1022
        %v1024 = vpop.f32.mrf.mxu0
        %v1025 = vpop.f32.mrf.mxu0
        %v1026 = vadd.f32 0.0, %v1025
        %v1027 = vpop.f32.mrf.mxu0
        %1028 = vmatprep.mubr.bf16.mxu0 %v623
        %1029 = vmatmul.mubr.bf16.gmra.mxu0 %v622
        %v1030 = vpop.f32.mrf.mxu0
        %v1031 = vadd.f32 0.0, %v1030
        %v1032 = vpop.f32.mrf.mxu0
        %v1033 = vpop.f32.mrf.mxu0
        %v1034 = vadd.f32 0.0, %v1033
        %v1035 = vpop.f32.mrf.mxu0
        %1036 = vmatprep.mubr.bf16.mxu0 %v625
        %1037 = vmatmul.mubr.bf16.gmra.mxu0 %v624
        %v1038 = vpop.f32.mrf.mxu0
        %v1039 = vadd.f32 0.0, %v1038
        %v1040 = vpop.f32.mrf.mxu0
        %v1041 = vpop.f32.mrf.mxu0
        %v1042 = vadd.f32 0.0, %v1041
        %v1043 = vpop.f32.mrf.mxu0
        %1044 = vmatprep.mubr.bf16.mxu0 %v627
        %1045 = vmatmul.mubr.bf16.gmra.mxu0 %v626
        %v1046 = vpop.f32.mrf.mxu0
        %v1047 = vadd.f32 0.0, %v1046
        %v1048 = vpop.f32.mrf.mxu0
        %v1049 = vpop.f32.mrf.mxu0
        %v1050 = vadd.f32 0.0, %v1049
        %v1051 = vpop.f32.mrf.mxu0
        %1052 = vmatprep.mubr.bf16.mxu0 %v629
        %1053 = vmatmul.mubr.bf16.gmra.mxu0 %v628
        %v1054 = vpop.f32.mrf.mxu0
        %v1055 = vadd.f32 0.0, %v1054
        %v1056 = vpop.f32.mrf.mxu0
        %v1057 = vpop.f32.mrf.mxu0
        %v1058 = vadd.f32 0.0, %v1057
        %v1059 = vpop.f32.mrf.mxu0
        %1060 = vmatprep.mubr.bf16.mxu0 %v631
        %1061 = vmatmul.mubr.bf16.gmra.mxu0 %v630
        %v1062 = vpop.f32.mrf.mxu0
        %v1063 = vadd.f32 0.0, %v1062
        %v1064 = vpop.f32.mrf.mxu0
        %v1065 = vpop.f32.mrf.mxu0
        %v1066 = vadd.f32 0.0, %v1065
        %v1067 = vpop.f32.mrf.mxu0
        %1068 = vmatprep.mubr.bf16.mxu0 %v633
        %1069 = vmatmul.mubr.bf16.gmra.mxu0 %v632
        %v1070 = vpop.f32.mrf.mxu0
        %v1071 = vadd.f32 0.0, %v1070
        %v1072 = vpop.f32.mrf.mxu0
        %v1073 = vpop.f32.mrf.mxu0
        %v1074 = vadd.f32 0.0, %v1073
        %v1075 = vpop.f32.mrf.mxu0
        %1076 = vmatprep.mubr.bf16.mxu0 %v635
        %1077 = vmatmul.mubr.bf16.gmra.mxu0 %v634
        %v1078 = vpop.f32.mrf.mxu0
        %v1079 = vadd.f32 0.0, %v1078
        %v1080 = vpop.f32.mrf.mxu0
        %v1081 = vpop.f32.mrf.mxu0
        %v1082 = vadd.f32 0.0, %v1081
        %v1083 = vpop.f32.mrf.mxu0
        %1084 = vdwg.mxu0
        %v1085 = vld [vmem:[%s278] sm:$0x1]
        %v1087 = vlaneseq
        %v1088 = vshrl.u32 %v1087, 7
        %v1089 = vsub.s32 0, %v1088
        %v1090 = vrot.slane %v1085, %v1089
        %v1092 = vmul.f32 %v831, %v1090
        %v1093 = vmul.f32 %v834, %v1090
        %v1094 = vmul.f32 %v839, %v1090
        %v1095 = vmul.f32 %v842, %v1090
        %v1096 = vmul.f32 %v847, %v1090
        %v1097 = vmul.f32 %v850, %v1090
        %v1098 = vmul.f32 %v855, %v1090
        %v1099 = vmul.f32 %v858, %v1090
        %v1100 = vmul.f32 %v863, %v1090
        %v1101 = vmul.f32 %v866, %v1090
        %v1102 = vmul.f32 %v871, %v1090
        %v1103 = vmul.f32 %v874, %v1090
        %v1104 = vmul.f32 %v879, %v1090
        %v1105 = vmul.f32 %v882, %v1090
        %v1106 = vmul.f32 %v887, %v1090
        %v1107 = vmul.f32 %v890, %v1090
        %v1108 = vmul.f32 %v895, %v1090
        %v1109 = vmul.f32 %v898, %v1090
        %v1110 = vmul.f32 %v903, %v1090
        %v1111 = vmul.f32 %v906, %v1090
        %v1112 = vmul.f32 %v911, %v1090
        %v1113 = vmul.f32 %v914, %v1090
        %v1114 = vmul.f32 %v919, %v1090
        %v1115 = vmul.f32 %v922, %v1090
        %v1116 = vmul.f32 %v927, %v1090
        %v1117 = vmul.f32 %v930, %v1090
        %v1118 = vmul.f32 %v935, %v1090
        %v1119 = vmul.f32 %v938, %v1090
        %v1120 = vmul.f32 %v943, %v1090
        %v1121 = vmul.f32 %v946, %v1090
        %v1122 = vmul.f32 %v951, %v1090
        %v1123 = vmul.f32 %v954, %v1090
        %v1124 = vmul.f32 %v959, %v1090
        %v1125 = vmul.f32 %v962, %v1090
        %v1126 = vmul.f32 %v967, %v1090
        %v1127 = vmul.f32 %v970, %v1090
        %v1128 = vmul.f32 %v975, %v1090
        %v1129 = vmul.f32 %v978, %v1090
        %v1130 = vmul.f32 %v983, %v1090
        %v1131 = vmul.f32 %v986, %v1090
        %v1132 = vmul.f32 %v991, %v1090
        %v1133 = vmul.f32 %v994, %v1090
        %v1134 = vmul.f32 %v999, %v1090
        %v1135 = vmul.f32 %v1002, %v1090
        %v1136 = vmul.f32 %v1007, %v1090
        %v1137 = vmul.f32 %v1010, %v1090
        %v1138 = vmul.f32 %v1015, %v1090
        %v1139 = vmul.f32 %v1018, %v1090
        %v1140 = vmul.f32 %v1023, %v1090
        %v1141 = vmul.f32 %v1026, %v1090
        %v1142 = vmul.f32 %v1031, %v1090
        %v1143 = vmul.f32 %v1034, %v1090
        %v1144 = vmul.f32 %v1039, %v1090
        %v1145 = vmul.f32 %v1042, %v1090
        %v1146 = vmul.f32 %v1047, %v1090
        %v1147 = vmul.f32 %v1050, %v1090
        %v1148 = vmul.f32 %v1055, %v1090
        %v1149 = vmul.f32 %v1058, %v1090
        %v1150 = vmul.f32 %v1063, %v1090
        %v1151 = vmul.f32 %v1066, %v1090
        %v1152 = vmul.f32 %v1071, %v1090
        %v1153 = vmul.f32 %v1074, %v1090
        %v1154 = vmul.f32 %v1079, %v1090
        %v1155 = vmul.f32 %v1082, %v1090
        %v1156 = vld [vmem:[%s281] sm:$0x1]
        %v1158 = vlaneseq
        %v1159 = vshrl.u32 %v1158, 7
        %v1160 = vsub.s32 0, %v1159
        %v1161 = vrot.slane %v1156, %v1160
        %v1163 = vadd.f32 %v1092, %v1161
        %v1164 = vadd.f32 %v1093, %v1161
        %v1165 = vadd.f32 %v1094, %v1161
        %v1166 = vadd.f32 %v1095, %v1161
        %v1167 = vadd.f32 %v1096, %v1161
        %v1168 = vadd.f32 %v1097, %v1161
        %v1169 = vadd.f32 %v1098, %v1161
        %v1170 = vadd.f32 %v1099, %v1161
        %v1171 = vadd.f32 %v1100, %v1161
        %v1172 = vadd.f32 %v1101, %v1161
        %v1173 = vadd.f32 %v1102, %v1161
        %v1174 = vadd.f32 %v1103, %v1161
        %v1175 = vadd.f32 %v1104, %v1161
        %v1176 = vadd.f32 %v1105, %v1161
        %v1177 = vadd.f32 %v1106, %v1161
        %v1178 = vadd.f32 %v1107, %v1161
        %v1179 = vadd.f32 %v1108, %v1161
        %v1180 = vadd.f32 %v1109, %v1161
        %v1181 = vadd.f32 %v1110, %v1161
        %v1182 = vadd.f32 %v1111, %v1161
        %v1183 = vadd.f32 %v1112, %v1161
        %v1184 = vadd.f32 %v1113, %v1161
        %v1185 = vadd.f32 %v1114, %v1161
        %v1186 = vadd.f32 %v1115, %v1161
        %v1187 = vadd.f32 %v1116, %v1161
        %v1188 = vadd.f32 %v1117, %v1161
        %v1189 = vadd.f32 %v1118, %v1161
        %v1190 = vadd.f32 %v1119, %v1161
        %v1191 = vadd.f32 %v1120, %v1161
        %v1192 = vadd.f32 %v1121, %v1161
        %v1193 = vadd.f32 %v1122, %v1161
        %v1194 = vadd.f32 %v1123, %v1161
        %v1195 = vadd.f32 %v1124, %v1161
        %v1196 = vadd.f32 %v1125, %v1161
        %v1197 = vadd.f32 %v1126, %v1161
        %v1198 = vadd.f32 %v1127, %v1161
        %v1199 = vadd.f32 %v1128, %v1161
        %v1200 = vadd.f32 %v1129, %v1161
        %v1201 = vadd.f32 %v1130, %v1161
        %v1202 = vadd.f32 %v1131, %v1161
        %v1203 = vadd.f32 %v1132, %v1161
        %v1204 = vadd.f32 %v1133, %v1161
        %v1205 = vadd.f32 %v1134, %v1161
        %v1206 = vadd.f32 %v1135, %v1161
        %v1207 = vadd.f32 %v1136, %v1161
        %v1208 = vadd.f32 %v1137, %v1161
        %v1209 = vadd.f32 %v1138, %v1161
        %v1210 = vadd.f32 %v1139, %v1161
        %v1211 = vadd.f32 %v1140, %v1161
        %v1212 = vadd.f32 %v1141, %v1161
        %v1213 = vadd.f32 %v1142, %v1161
        %v1214 = vadd.f32 %v1143, %v1161
        %v1215 = vadd.f32 %v1144, %v1161
        %v1216 = vadd.f32 %v1145, %v1161
        %v1217 = vadd.f32 %v1146, %v1161
        %v1218 = vadd.f32 %v1147, %v1161
        %v1219 = vadd.f32 %v1148, %v1161
        %v1220 = vadd.f32 %v1149, %v1161
        %v1221 = vadd.f32 %v1150, %v1161
        %v1222 = vadd.f32 %v1151, %v1161
        %v1223 = vadd.f32 %v1152, %v1161
        %v1224 = vadd.f32 %v1153, %v1161
        %v1225 = vadd.f32 %v1154, %v1161
        %v1226 = vadd.f32 %v1155, %v1161
        %v1227 = vmax.f32 %v1163, 0.0
        %v1228 = vmax.f32 %v1164, 0.0
        %v1229 = vmax.f32 %v1165, 0.0
        %v1230 = vmax.f32 %v1166, 0.0
        %v1231 = vmax.f32 %v1167, 0.0
        %v1232 = vmax.f32 %v1168, 0.0
        %v1233 = vmax.f32 %v1169, 0.0
        %v1234 = vmax.f32 %v1170, 0.0
        %v1235 = vmax.f32 %v1171, 0.0
        %v1236 = vmax.f32 %v1172, 0.0
        %v1237 = vmax.f32 %v1173, 0.0
        %v1238 = vmax.f32 %v1174, 0.0
        %v1239 = vmax.f32 %v1175, 0.0
        %v1240 = vmax.f32 %v1176, 0.0
        %v1241 = vmax.f32 %v1177, 0.0
        %v1242 = vmax.f32 %v1178, 0.0
        %v1243 = vmax.f32 %v1179, 0.0
        %v1244 = vmax.f32 %v1180, 0.0
        %v1245 = vmax.f32 %v1181, 0.0
        %v1246 = vmax.f32 %v1182, 0.0
        %v1247 = vmax.f32 %v1183, 0.0
        %v1248 = vmax.f32 %v1184, 0.0
        %v1249 = vmax.f32 %v1185, 0.0
        %v1250 = vmax.f32 %v1186, 0.0
        %v1251 = vmax.f32 %v1187, 0.0
        %v1252 = vmax.f32 %v1188, 0.0
        %v1253 = vmax.f32 %v1189, 0.0
        %v1254 = vmax.f32 %v1190, 0.0
        %v1255 = vmax.f32 %v1191, 0.0
        %v1256 = vmax.f32 %v1192, 0.0
        %v1257 = vmax.f32 %v1193, 0.0
        %v1258 = vmax.f32 %v1194, 0.0
        %v1259 = vmax.f32 %v1195, 0.0
        %v1260 = vmax.f32 %v1196, 0.0
        %v1261 = vmax.f32 %v1197, 0.0
        %v1262 = vmax.f32 %v1198, 0.0
        %v1263 = vmax.f32 %v1199, 0.0
        %v1264 = vmax.f32 %v1200, 0.0
        %v1265 = vmax.f32 %v1201, 0.0
        %v1266 = vmax.f32 %v1202, 0.0
        %v1267 = vmax.f32 %v1203, 0.0
        %v1268 = vmax.f32 %v1204, 0.0
        %v1269 = vmax.f32 %v1205, 0.0
        %v1270 = vmax.f32 %v1206, 0.0
        %v1271 = vmax.f32 %v1207, 0.0
        %v1272 = vmax.f32 %v1208, 0.0
        %v1273 = vmax.f32 %v1209, 0.0
        %v1274 = vmax.f32 %v1210, 0.0
        %v1275 = vmax.f32 %v1211, 0.0
        %v1276 = vmax.f32 %v1212, 0.0
        %v1277 = vmax.f32 %v1213, 0.0
        %v1278 = vmax.f32 %v1214, 0.0
        %v1279 = vmax.f32 %v1215, 0.0
        %v1280 = vmax.f32 %v1216, 0.0
        %v1281 = vmax.f32 %v1217, 0.0
        %v1282 = vmax.f32 %v1218, 0.0
        %v1283 = vmax.f32 %v1219, 0.0
        %v1284 = vmax.f32 %v1220, 0.0
        %v1285 = vmax.f32 %v1221, 0.0
        %v1286 = vmax.f32 %v1222, 0.0
        %v1287 = vmax.f32 %v1223, 0.0
        %v1288 = vmax.f32 %v1224, 0.0
        %v1289 = vmax.f32 %v1225, 0.0
        %v1290 = vmax.f32 %v1226, 0.0
        %v1291 = vpack.c.bf16 %v1228, %v1227
        %v1292 = vpack.c.bf16 %v1230, %v1229
        %v1293 = vpack.c.bf16 %v1232, %v1231
        %v1294 = vpack.c.bf16 %v1234, %v1233
        %v1295 = vpack.c.bf16 %v1236, %v1235
        %v1296 = vpack.c.bf16 %v1238, %v1237
        %v1297 = vpack.c.bf16 %v1240, %v1239
        %v1298 = vpack.c.bf16 %v1242, %v1241
        %v1299 = vpack.c.bf16 %v1244, %v1243
        %v1300 = vpack.c.bf16 %v1246, %v1245
        %v1301 = vpack.c.bf16 %v1248, %v1247
        %v1302 = vpack.c.bf16 %v1250, %v1249
        %v1303 = vpack.c.bf16 %v1252, %v1251
        %v1304 = vpack.c.bf16 %v1254, %v1253
        %v1305 = vpack.c.bf16 %v1256, %v1255
        %v1306 = vpack.c.bf16 %v1258, %v1257
        %v1307 = vpack.c.bf16 %v1260, %v1259
        %v1308 = vpack.c.bf16 %v1262, %v1261
        %v1309 = vpack.c.bf16 %v1264, %v1263
        %v1310 = vpack.c.bf16 %v1266, %v1265
        %v1311 = vpack.c.bf16 %v1268, %v1267
        %v1312 = vpack.c.bf16 %v1270, %v1269
        %v1313 = vpack.c.bf16 %v1272, %v1271
        %v1314 = vpack.c.bf16 %v1274, %v1273
        %v1315 = vpack.c.bf16 %v1276, %v1275
        %v1316 = vpack.c.bf16 %v1278, %v1277
        %v1317 = vpack.c.bf16 %v1280, %v1279
        %v1318 = vpack.c.bf16 %v1282, %v1281
        %v1319 = vpack.c.bf16 %v1284, %v1283
        %v1320 = vpack.c.bf16 %v1286, %v1285
        %v1321 = vpack.c.bf16 %v1288, %v1287
        %v1322 = vpack.c.bf16 %v1290, %v1289
        %v1355 = vunpack.c.l.b16 %v1291
        %v1356 = vunpack.c.h.b16 %v1291
        %v1357 = vunpack.c.l.b16 %v1292
        %v1358 = vunpack.c.h.b16 %v1292
        %v1359 = vunpack.c.l.b16 %v1293
        %v1360 = vunpack.c.h.b16 %v1293
        %v1361 = vunpack.c.l.b16 %v1294
        %v1362 = vunpack.c.h.b16 %v1294
        %v1363 = vunpack.c.l.b16 %v1295
        %v1364 = vunpack.c.h.b16 %v1295
        %v1365 = vunpack.c.l.b16 %v1296
        %v1366 = vunpack.c.h.b16 %v1296
        %v1367 = vunpack.c.l.b16 %v1297
        %v1368 = vunpack.c.h.b16 %v1297
        %v1369 = vunpack.c.l.b16 %v1298
        %v1370 = vunpack.c.h.b16 %v1298
        %v1371 = vunpack.c.l.b16 %v1299
        %v1372 = vunpack.c.h.b16 %v1299
        %v1373 = vunpack.c.l.b16 %v1300
        %v1374 = vunpack.c.h.b16 %v1300
        %v1375 = vunpack.c.l.b16 %v1301
        %v1376 = vunpack.c.h.b16 %v1301
        %v1377 = vunpack.c.l.b16 %v1302
        %v1378 = vunpack.c.h.b16 %v1302
        %v1379 = vunpack.c.l.b16 %v1303
        %v1380 = vunpack.c.h.b16 %v1303
        %v1381 = vunpack.c.l.b16 %v1304
        %v1382 = vunpack.c.h.b16 %v1304
        %v1383 = vunpack.c.l.b16 %v1305
        %v1384 = vunpack.c.h.b16 %v1305
        %v1385 = vunpack.c.l.b16 %v1306
        %v1386 = vunpack.c.h.b16 %v1306
        %v1387 = vunpack.c.l.b16 %v1307
        %v1388 = vunpack.c.h.b16 %v1307
        %v1389 = vunpack.c.l.b16 %v1308
        %v1390 = vunpack.c.h.b16 %v1308
        %v1391 = vunpack.c.l.b16 %v1309
        %v1392 = vunpack.c.h.b16 %v1309
        %v1393 = vunpack.c.l.b16 %v1310
        %v1394 = vunpack.c.h.b16 %v1310
        %v1395 = vunpack.c.l.b16 %v1311
        %v1396 = vunpack.c.h.b16 %v1311
        %v1397 = vunpack.c.l.b16 %v1312
        %v1398 = vunpack.c.h.b16 %v1312
        %v1399 = vunpack.c.l.b16 %v1313
        %v1400 = vunpack.c.h.b16 %v1313
        %v1401 = vunpack.c.l.b16 %v1314
        %v1402 = vunpack.c.h.b16 %v1314
        %v1403 = vunpack.c.l.b16 %v1315
        %v1404 = vunpack.c.h.b16 %v1315
        %v1405 = vunpack.c.l.b16 %v1316
        %v1406 = vunpack.c.h.b16 %v1316
        %v1407 = vunpack.c.l.b16 %v1317
        %v1408 = vunpack.c.h.b16 %v1317
        %v1409 = vunpack.c.l.b16 %v1318
        %v1410 = vunpack.c.h.b16 %v1318
        %v1411 = vunpack.c.l.b16 %v1319
        %v1412 = vunpack.c.h.b16 %v1319
        %v1413 = vunpack.c.l.b16 %v1320
        %v1414 = vunpack.c.h.b16 %v1320
        %v1415 = vunpack.c.l.b16 %v1321
        %v1416 = vunpack.c.h.b16 %v1321
        %v1417 = vunpack.c.l.b16 %v1322
        %v1418 = vunpack.c.h.b16 %v1322
        %v1419 = vpack.c.b16 %v1355, %v1355
        %v1420 = vpack.c.b16 %v1356, %v1356
        %v1421 = vpack.c.b16 %v1357, %v1357
        %v1422 = vpack.c.b16 %v1358, %v1358
        %v1423 = vpack.c.b16 %v1359, %v1359
        %v1424 = vpack.c.b16 %v1360, %v1360
        %v1425 = vpack.c.b16 %v1361, %v1361
        %v1426 = vpack.c.b16 %v1362, %v1362
        %v1427 = vpack.c.b16 %v1363, %v1363
        %v1428 = vpack.c.b16 %v1364, %v1364
        %v1429 = vpack.c.b16 %v1365, %v1365
        %v1430 = vpack.c.b16 %v1366, %v1366
        %v1431 = vpack.c.b16 %v1367, %v1367
        %v1432 = vpack.c.b16 %v1368, %v1368
        %v1433 = vpack.c.b16 %v1369, %v1369
        %v1434 = vpack.c.b16 %v1370, %v1370
        %v1435 = vpack.c.b16 %v1371, %v1371
        %v1436 = vpack.c.b16 %v1372, %v1372
        %v1437 = vpack.c.b16 %v1373, %v1373
        %v1438 = vpack.c.b16 %v1374, %v1374
        %v1439 = vpack.c.b16 %v1375, %v1375
        %v1440 = vpack.c.b16 %v1376, %v1376
        %v1441 = vpack.c.b16 %v1377, %v1377
        %v1442 = vpack.c.b16 %v1378, %v1378
        %v1443 = vpack.c.b16 %v1379, %v1379
        %v1444 = vpack.c.b16 %v1380, %v1380
        %v1445 = vpack.c.b16 %v1381, %v1381
        %v1446 = vpack.c.b16 %v1382, %v1382
        %v1447 = vpack.c.b16 %v1383, %v1383
        %v1448 = vpack.c.b16 %v1384, %v1384
        %v1449 = vpack.c.b16 %v1385, %v1385
        %v1450 = vpack.c.b16 %v1386, %v1386
        %v1451 = vpack.c.b16 %v1387, %v1387
        %v1452 = vpack.c.b16 %v1388, %v1388
        %v1453 = vpack.c.b16 %v1389, %v1389
        %v1454 = vpack.c.b16 %v1390, %v1390
        %v1455 = vpack.c.b16 %v1391, %v1391
        %v1456 = vpack.c.b16 %v1392, %v1392
        %v1457 = vpack.c.b16 %v1393, %v1393
        %v1458 = vpack.c.b16 %v1394, %v1394
        %v1459 = vpack.c.b16 %v1395, %v1395
        %v1460 = vpack.c.b16 %v1396, %v1396
        %v1461 = vpack.c.b16 %v1397, %v1397
        %v1462 = vpack.c.b16 %v1398, %v1398
        %v1463 = vpack.c.b16 %v1399, %v1399
        %v1464 = vpack.c.b16 %v1400, %v1400
        %v1465 = vpack.c.b16 %v1401, %v1401
        %v1466 = vpack.c.b16 %v1402, %v1402
        %v1467 = vpack.c.b16 %v1403, %v1403
        %v1468 = vpack.c.b16 %v1404, %v1404
        %v1469 = vpack.c.b16 %v1405, %v1405
        %v1470 = vpack.c.b16 %v1406, %v1406
        %v1471 = vpack.c.b16 %v1407, %v1407
        %v1472 = vpack.c.b16 %v1408, %v1408
        %v1473 = vpack.c.b16 %v1409, %v1409
        %v1474 = vpack.c.b16 %v1410, %v1410
        %v1475 = vpack.c.b16 %v1411, %v1411
        %v1476 = vpack.c.b16 %v1412, %v1412
        %v1477 = vpack.c.b16 %v1413, %v1413
        %v1478 = vpack.c.b16 %v1414, %v1414
        %v1479 = vpack.c.b16 %v1415, %v1415
        %v1480 = vpack.c.b16 %v1416, %v1416
        %v1481 = vpack.c.b16 %v1417, %v1417
        %v1482 = vpack.c.b16 %v1418, %v1418
        %1547 = vst [vmem:[%s274] sm:$0xf] %v1419
        %1548 = vst [vmem:[%s274 + $0x4] sm:$0xf] %v1420
        %1549 = vst [vmem:[%s274 + $0x8] sm:$0xf] %v1421
        %1550 = vst [vmem:[%s274 + $0xc] sm:$0xf] %v1422
        %1551 = vst [vmem:[%s274 + $0x10] sm:$0xf] %v1423
        %1552 = vst [vmem:[%s274 + $0x14] sm:$0xf] %v1424
        %1553 = vst [vmem:[%s274 + $0x18] sm:$0xf] %v1425
        %1554 = vst [vmem:[%s274 + $0x1c] sm:$0xf] %v1426
        %1555 = vst [vmem:[%s274 + $0x20] sm:$0xf] %v1427
        %1556 = vst [vmem:[%s274 + $0x24] sm:$0xf] %v1428
        %1557 = vst [vmem:[%s274 + $0x28] sm:$0xf] %v1429
        %1558 = vst [vmem:[%s274 + $0x2c] sm:$0xf] %v1430
        %1559 = vst [vmem:[%s274 + $0x30] sm:$0xf] %v1431
        %1560 = vst [vmem:[%s274 + $0x34] sm:$0xf] %v1432
        %1561 = vst [vmem:[%s274 + $0x38] sm:$0xf] %v1433
        %1562 = vst [vmem:[%s274 + $0x3c] sm:$0xf] %v1434
        %1563 = vst [vmem:[%s274 + $0x40] sm:$0xf] %v1435
        %1564 = vst [vmem:[%s274 + $0x44] sm:$0xf] %v1436
        %1565 = vst [vmem:[%s274 + $0x48] sm:$0xf] %v1437
        %1566 = vst [vmem:[%s274 + $0x4c] sm:$0xf] %v1438
        %1567 = vst [vmem:[%s274 + $0x50] sm:$0xf] %v1439
        %1568 = vst [vmem:[%s274 + $0x54] sm:$0xf] %v1440
        %1569 = vst [vmem:[%s274 + $0x58] sm:$0xf] %v1441
        %1570 = vst [vmem:[%s274 + $0x5c] sm:$0xf] %v1442
        %1571 = vst [vmem:[%s274 + $0x60] sm:$0xf] %v1443
        %1572 = vst [vmem:[%s274 + $0x64] sm:$0xf] %v1444
        %1573 = vst [vmem:[%s274 + $0x68] sm:$0xf] %v1445
        %1574 = vst [vmem:[%s274 + $0x6c] sm:$0xf] %v1446
        %1575 = vst [vmem:[%s274 + $0x70] sm:$0xf] %v1447
        %1576 = vst [vmem:[%s274 + $0x74] sm:$0xf] %v1448
        %1577 = vst [vmem:[%s274 + $0x78] sm:$0xf] %v1449
        %1578 = vst [vmem:[%s274 + $0x7c] sm:$0xf] %v1450
        %1579 = vst [vmem:[%s274 + $0x80] sm:$0xf] %v1451
        %1580 = vst [vmem:[%s274 + $0x84] sm:$0xf] %v1452
        %1581 = vst [vmem:[%s274 + $0x88] sm:$0xf] %v1453
        %1582 = vst [vmem:[%s274 + $0x8c] sm:$0xf] %v1454
        %1583 = vst [vmem:[%s274 + $0x90] sm:$0xf] %v1455
        %1584 = vst [vmem:[%s274 + $0x94] sm:$0xf] %v1456
        %1585 = vst [vmem:[%s274 + $0x98] sm:$0xf] %v1457
        %1586 = vst [vmem:[%s274 + $0x9c] sm:$0xf] %v1458
        %1587 = vst [vmem:[%s274 + $0xa0] sm:$0xf] %v1459
        %1588 = vst [vmem:[%s274 + $0xa4] sm:$0xf] %v1460
        %1589 = vst [vmem:[%s274 + $0xa8] sm:$0xf] %v1461
        %1590 = vst [vmem:[%s274 + $0xac] sm:$0xf] %v1462
        %1591 = vst [vmem:[%s274 + $0xb0] sm:$0xf] %v1463
        %1592 = vst [vmem:[%s274 + $0xb4] sm:$0xf] %v1464
        %1593 = vst [vmem:[%s274 + $0xb8] sm:$0xf] %v1465
        %1594 = vst [vmem:[%s274 + $0xbc] sm:$0xf] %v1466
        %1595 = vst [vmem:[%s274 + $0xc0] sm:$0xf] %v1467
        %1596 = vst [vmem:[%s274 + $0xc4] sm:$0xf] %v1468
        %1597 = vst [vmem:[%s274 + $0xc8] sm:$0xf] %v1469
        %1598 = vst [vmem:[%s274 + $0xcc] sm:$0xf] %v1470
        %1599 = vst [vmem:[%s274 + $0xd0] sm:$0xf] %v1471
        %1600 = vst [vmem:[%s274 + $0xd4] sm:$0xf] %v1472
        %1601 = vst [vmem:[%s274 + $0xd8] sm:$0xf] %v1473
        %1602 = vst [vmem:[%s274 + $0xdc] sm:$0xf] %v1474
        %1603 = vst [vmem:[%s274 + $0xe0] sm:$0xf] %v1475
        %1604 = vst [vmem:[%s274 + $0xe4] sm:$0xf] %v1476
        %1605 = vst [vmem:[%s274 + $0xe8] sm:$0xf] %v1477
        %1606 = vst [vmem:[%s274 + $0xec] sm:$0xf] %v1478
        %1607 = vst [vmem:[%s274 + $0xf0] sm:$0xf] %v1479
        %1608 = vst [vmem:[%s274 + $0xf4] sm:$0xf] %v1480
        %1609 = vst [vmem:[%s274 + $0xf8] sm:$0xf] %v1481
        %1610 = vst [vmem:[%s274 + $0xfc] sm:$0xf] %v1482
        %s1611 = sand.u32 %s148, 1
        %s1612 = scalar_lea.sflag [#allocation4], %s1611
        %s1613 = sand.u32 %s148, 1
        %s1614 = smul.addr %s1613, 256
        %s1615 = scalar_lea.vmem [#allocation7], %s1614
        // Predicated region
        $region45: #{tpu_custom_call.1} parent=35 // pred_check
          %p1616 = pneg %p158
        $region46: #{tpu_custom_call.1} parent=35 // pred_check_branch
          %1618 = sbr.rel (%p1616) target = $region48
        $region47: #{tpu_custom_call.1} parent=35 // pred_region
          %s1619 = smul.u32 64, %s26
          %s1621 = ssub.s32 4096, 4096
          %1622 = vsyncadd %s1612, %s1621
          %s1623 = sadd.s32 %s27, %s1619
          %s1624 = smul.addr %s1623, 64
          %s1625 = scalar_lea.hbm %s4, %s1624
          %s1626 = sshll.u32 %s1615, 4
          %s1627 = int_to_ptr.vmem [resolvable:$true] %s1626
          %1632 = dma.vmem_to_hbm [thread:$0]  %s1627, 4096, %s1625, %s1612, 64, 64, 4
        $region48: #{tpu_custom_call.1} parent=35 // pred_fallthru
          _
      $region36: #{tpu_custom_call.1} parent=5 // pred_fallthru
        _
      %p1633 = scmp.le.s32.totalorder 2, %s17
      // Predicated region
      $region49: #{tpu_custom_call.1} parent=5 // pred_check
        %p1634 = pneg %p1633
      $region50: #{tpu_custom_call.1} parent=5 // pred_check_branch
        %1636 = sbr.rel (%p1634) target = $region52
      $region51: #{tpu_custom_call.1} parent=5 // pred_region
        %s1637 = ssub.s32 %s17, 2
        // Predicated region
        $region53: #{tpu_custom_call.1} parent=51 // pred_check
          %p1638 = pneg %p164
        $region54: #{tpu_custom_call.1} parent=51 // pred_check_branch
          %1640 = sbr.rel (%p1638) target = $region56
        $region55: #{tpu_custom_call.1} parent=51 // pred_region
          %s1641 = sand.u32 %s149, 1
          %s1642 = scalar_lea.sflag [#allocation4], %s1641
          %s1643 = sand.u32 %s149, 1
          %s1644 = smul.addr %s1643, 256
          %s1645 = scalar_lea.vmem [#allocation7], %s1644
          %1646 = dma.done %s1642, 4096
        $region56: #{tpu_custom_call.1} parent=51 // pred_fallthru
          _
      $region52: #{tpu_custom_call.1} parent=5 // pred_fallthru
        _
    $region6: #{tpu_custom_call.1} parent=1 // loop_footer
      %s21 = sadd.s32 1, %s17
    $region7: #{tpu_custom_call.1} parent=1 // loop_footer_branch
      %16 = sbr.rel target = $region3
    $region8: #{tpu_custom_call.1} parent=1 // loop_exit
      _
    %1647 = vsyncpa [#allocation3], 1
    %s1648 = scalar_lea.sflag [#allocation3], 1
    %1649 = vsyncpa %s1648, 1
    %1650 = vsyncpa [#allocation6], 1
    %1651 = vsyncpa [#allocation4], 1
    %s1652 = scalar_lea.sflag [#allocation4], 1
    %1653 = vsyncpa %s1652, 1

</llo_original>
